<compile_context>
chip_gen: v5e
topology: v5e:2x2
jax: 0.10.0
libtpu: 0.0.40
codegen_flags: <defaults>
</compile_context>

<pallas_src>
import functools
import math

import jax
import jax.numpy as jnp
from jax.experimental import pallas as pl
from jax.experimental.pallas import tpu as pltpu


# ----------------------------------------------------------------------------
# Kernel: one grid step == one LSTM layer (weights streamed per layer)
# ----------------------------------------------------------------------------
def _decoder_step_kernel(
    tok_ref,              # SMEM (B,) int32  — scalar-prefetched token ids
    emb_ref,              # HBM  (V, E) f32  — embedding table (ANY space)
    h_ref, c_ref,         # VMEM (B, H) f32  — this layer's previous state
    w_ih_ref,             # VMEM (IN_PAD, 4H) bf16 — streamed per layer
    w_hh_ref,             # VMEM (H, 4H)      bf16 — streamed per layer
    b_ref,                # VMEM (1, 4H)      f32  — streamed per layer
    w_out_ref,            # VMEM (H, O)       bf16 — resident across layers
    b_out_ref,            # VMEM (1, O)       f32  — resident across layers
    pred_ref,             # VMEM (B, O) f32 out
    h_out_ref, c_out_ref, # VMEM (B, H) f32 out
    x_scr,                # VMEM (B, IN_PAD) f32 scratch — layer input carry
    gather_sems,          # DMA semaphores (B,)
    *, n_layers, emb_dim, hid_dim, vocab,
):
    layer = pl.program_id(0)
    B, in_pad = x_scr.shape
    H = hid_dim

    # ---- layer 0: DMA-gather the B embedding rows from HBM into x_scr ------
    @pl.when(layer == 0)
    def _():
        if in_pad > emb_dim:  # static padding branch (not taken when E == H)
            x_scr[:, emb_dim:] = jnp.zeros((B, in_pad - emb_dim), jnp.float32)
        copies = []
        for b in range(B):  # B is small and static
            tok = jnp.minimum(jnp.maximum(tok_ref[b], 0), vocab - 1)  # guard OOB
            copies.append(
                pltpu.make_async_copy(
                    emb_ref.at[pl.ds(tok, 1), :],
                    x_scr.at[pl.ds(b, 1), pl.ds(0, emb_dim)],
                    gather_sems.at[b],
                )
            )
        for cp in copies:
            cp.start()
        for cp in copies:
            cp.wait()
        # TODO(synk): self.dropout(embedded) -> identity (eval mode).

    # ---- one LSTM cell (bf16 operands, f32 accumulation) --------------------
    x = x_scr[...].astype(jnp.bfloat16)        # (B, IN_PAD)
    h = h_ref[...]                             # (B, H) f32
    c = c_ref[...]                             # (B, H) f32

    gates = (
        jnp.dot(x, w_ih_ref[...], preferred_element_type=jnp.float32)
        + jnp.dot(h.astype(jnp.bfloat16), w_hh_ref[...],
                  preferred_element_type=jnp.float32)
        + b_ref[...]
    )                                          # (B, 4H) f32

    # Gate order [i, f, o, g]: sigmoid on lane-aligned 3H slice, tanh on H.
    sig = jax.nn.sigmoid(gates[:, : 3 * H])
    i_g = sig[:, 0 * H: 1 * H]
    f_g = sig[:, 1 * H: 2 * H]
    o_g = sig[:, 2 * H: 3 * H]
    g_g = jnp.tanh(gates[:, 3 * H: 4 * H])

    c_new = f_g * c + i_g * g_g
    h_new = o_g * jnp.tanh(c_new)

    h_out_ref[...] = h_new
    c_out_ref[...] = c_new
    # Carry h_new as next layer's input (inter-layer dropout == identity).
    x_scr[:, :H] = h_new

    # ---- last layer: output projection ---------------------------------------
    @pl.when(layer == n_layers - 1)
    def _():
        pred_ref[...] = (
            jnp.dot(h_new.astype(jnp.bfloat16), w_out_ref[...],
                    preferred_element_type=jnp.float32)
            + b_out_ref[...]
        )


# ----------------------------------------------------------------------------
# Wrapper: one pallas_call for the whole decoder step
# ----------------------------------------------------------------------------
@functools.partial(jax.jit, static_argnames=("n_layers",))
def decoder_forward(params, tokens, hidden, cell, *, n_layers):
    """Mirrors Decoder.forward (single time step).

    tokens : (B,) int32, hidden/cell : (n_layers, B, H)
    returns (prediction (B, output_dim), hidden, cell)
    """
    B = tokens.shape[0]
    V, E = params["embedding"].shape
    _, in_pad, four_h = params["w_ih"].shape
    H = hidden.shape[-1]
    O = params["w_out"].shape[-1]

    tokens_i32 = tokens.astype(jnp.int32)

    grid_spec = pltpu.PrefetchScalarGridSpec(
        num_scalar_prefetch=1,          # token ids -> SMEM, feed DMA addressing
        grid=(n_layers,),               # layer axis (sequential dependency)
        in_specs=[
            pl.BlockSpec(memory_space=pl.ANY),                            # emb (HBM)
            pl.BlockSpec((None, B, H), lambda l, tok: (l, 0, 0)),         # hidden
            pl.BlockSpec((None, B, H), lambda l, tok: (l, 0, 0)),         # cell
            pl.BlockSpec((None, in_pad, four_h), lambda l, tok: (l, 0, 0)),  # W_ih
            pl.BlockSpec((None, H, four_h), lambda l, tok: (l, 0, 0)),       # W_hh
            pl.BlockSpec((None, 1, four_h), lambda l, tok: (l, 0, 0)),       # bias
            pl.BlockSpec((H, O), lambda l, tok: (0, 0)),                  # W_out
            pl.BlockSpec((1, O), lambda l, tok: (0, 0)),                  # b_out
        ],
        out_specs=(
            pl.BlockSpec((B, O), lambda l, tok: (0, 0)),                  # prediction
            pl.BlockSpec((None, B, H), lambda l, tok: (l, 0, 0)),         # new hidden
            pl.BlockSpec((None, B, H), lambda l, tok: (l, 0, 0)),         # new cell
        ),
        scratch_shapes=[
            pltpu.VMEM((B, in_pad), jnp.float32),   # layer input carried in VMEM
            pltpu.SemaphoreType.DMA((B,)),          # embedding-gather semaphores
        ],
    )

    flops = 2 * B * (in_pad + H) * four_h * n_layers + 2 * B * H * O
    transcendentals = n_layers * B * 5 * H
    bytes_accessed = (
        B * 4                                      # token ids
        + B * E * 4                                # gathered embedding rows
        + n_layers * (in_pad + H) * four_h * 2     # bf16 LSTM weights
        + n_layers * four_h * 4                    # biases
        + H * O * 2 + O * 4                        # output projection
        + 4 * n_layers * B * H * 4                 # h/c in + out
        + B * O * 4                                # prediction
    )

    pred, h_new, c_new = pl.pallas_call(
        functools.partial(
            _decoder_step_kernel,
            n_layers=n_layers, emb_dim=E, hid_dim=H, vocab=V),
        grid_spec=grid_spec,
        out_shape=(
            jax.ShapeDtypeStruct((B, O), jnp.float32),
            jax.ShapeDtypeStruct((n_layers, B, H), jnp.float32),
            jax.ShapeDtypeStruct((n_layers, B, H), jnp.float32),
        ),
        compiler_params=pltpu.CompilerParams(
            dimension_semantics=("arbitrary",),      # layers are sequential
            vmem_limit_bytes=32 * 1024 * 1024,
        ),
        cost_estimate=pl.CostEstimate(
            flops=flops,
            transcendentals=transcendentals,
            bytes_accessed=bytes_accessed,
        ),
    )(tokens_i32, params["embedding"], hidden, cell,
      params["w_ih"], params["w_hh"], params["b"],
      params["w_out"], params["b_out"])
    return pred, h_new, c_new


# ----------------------------------------------------------------------------
# Pure-JAX reference (same bf16 weights / f32 accumulation, for correctness)
# ----------------------------------------------------------------------------
def decoder_forward_ref(params, tokens, hidden, cell, n_layers):
    E = params["embedding"].shape[1]
    H = hidden.shape[-1]
    in_pad = params["w_ih"].shape[1]

    x = params["embedding"][tokens]                         # (B, E) f32
    x = jnp.pad(x, ((0, 0), (0, in_pad - E)))
    new_h, new_c = [], []
    for layer in range(n_layers):
        h, c = hidden[layer], cell[layer]
        gates = (
            jnp.dot(x.astype(jnp.bfloat16), params["w_ih"][layer],
                    preferred_element_type=jnp.float32)
            + jnp.dot(h.astype(jnp.bfloat16), params["w_hh"][layer],
                      preferred_element_type=jnp.float32)
            + params["b"][layer]
        )
        i_g = jax.nn.sigmoid(gates[:, 0 * H:1 * H])
        f_g = jax.nn.sigmoid(gates[:, 1 * H:2 * H])
        o_g = jax.nn.sigmoid(gates[:, 2 * H:3 * H])
        g_g = jnp.tanh(gates[:, 3 * H:4 * H])
        c_new = f_g * c + i_g * g_g
        h_new = o_g * jnp.tanh(c_new)
        new_h.append(h_new)
        new_c.append(c_new)
        x = jnp.pad(h_new, ((0, 0), (0, in_pad - H)))
    pred = (jnp.dot(new_h[-1].astype(jnp.bfloat16), params["w_out"],
                    preferred_element_type=jnp.float32) + params["b_out"])
    return pred, jnp.stack(new_h), jnp.stack(new_c)


# ----------------------------------------------------------------------------
# Parameter init (shapes mirror the PyTorch module).
# LSTM gates are stored in [i, f, o, g] column order (a permutation of torch's
# [i, f, g, o]); converting a torch checkpoint = transpose + permute columns.
# ----------------------------------------------------------------------------
def init_params(key, output_dim, emb_dim, hid_dim, n_layers):
    params = {}
    k = 1.0 / math.sqrt(hid_dim)
    in_pad = max(emb_dim, hid_dim)

    def uni(key, shape):
        return jax.random.uniform(key, shape, jnp.float32, minval=-k, maxval=k)

    keys = jax.random.split(key, 4 * n_layers + 3)
    ki = iter(range(len(keys)))

    # nn.Embedding(output_dim, emb_dim)
    params["embedding"] = jax.random.normal(
        keys[next(ki)], (output_dim, emb_dim), jnp.float32)

    # nn.LSTM(emb_dim, hid_dim, n_layers) — W_ih / W_hh stored transposed,
    # stacked over layers, bf16; bias = b_ih + b_hh, f32.
    w_ih_l, w_hh_l, b_l = [], [], []
    for layer in range(n_layers):
        in_dim = emb_dim if layer == 0 else hid_dim
        w_ih = uni(keys[next(ki)], (in_dim, 4 * hid_dim))
        w_hh = uni(keys[next(ki)], (hid_dim, 4 * hid_dim))
        b_ih = uni(keys[next(ki)], (1, 4 * hid_dim))
        b_hh = uni(keys[next(ki)], (1, 4 * hid_dim))
        w_ih = jnp.pad(w_ih, ((0, in_pad - in_dim), (0, 0)))   # zero-pad rows
        w_ih_l.append(w_ih)
        w_hh_l.append(w_hh)
        b_l.append(b_ih + b_hh)
    params["w_ih"] = jnp.stack(w_ih_l).astype(jnp.bfloat16)    # (L, in_pad, 4H)
    params["w_hh"] = jnp.stack(w_hh_l).astype(jnp.bfloat16)    # (L, H, 4H)
    params["b"] = jnp.stack(b_l)                               # (L, 1, 4H) f32

    # nn.Linear(hid_dim, output_dim) — stored transposed, bf16
    params["w_out"] = uni(keys[next(ki)], (hid_dim, output_dim)).astype(jnp.bfloat16)
    params["b_out"] = uni(keys[next(ki)], (1, output_dim))
    return params


# ----------------------------------------------------------------------------
if __name__ == "__main__":
    OUTPUT_DIM = 256   # vocab size == Linear output dim (lane-aligned)
    EMB_DIM = 128
    HID_DIM = 128
    N_LAYERS = 2
    BATCH = 8

    key = jax.random.PRNGKey(0)
    k_params, k_tok, k_h, k_c = jax.random.split(key, 4)

    params = init_params(k_params, OUTPUT_DIM, EMB_DIM, HID_DIM, N_LAYERS)

    tokens = jax.random.randint(k_tok, (BATCH,), 0, OUTPUT_DIM, jnp.int32)
    hidden = jax.random.normal(k_h, (N_LAYERS, BATCH, HID_DIM), jnp.float32)
    cell = jax.random.normal(k_c, (N_LAYERS, BATCH, HID_DIM), jnp.float32)

    pred, h_new, c_new = decoder_forward(
        params, tokens, hidden, cell, n_layers=N_LAYERS)
    jax.block_until_ready((pred, h_new, c_new))

    # correctness vs. pure-JAX reference (same bf16 weights / f32 accumulation)
    pred_r, h_r, c_r = decoder_forward_ref(params, tokens, hidden, cell, N_LAYERS)
    assert pred.shape == (BATCH, OUTPUT_DIM)
    assert h_new.shape == (N_LAYERS, BATCH, HID_DIM)
    assert c_new.shape == (N_LAYERS, BATCH, HID_DIM)
    assert jnp.allclose(pred, pred_r, atol=2e-2, rtol=2e-2)
    assert jnp.allclose(h_new, h_r, atol=2e-2, rtol=2e-2)
    assert jnp.allclose(c_new, c_r, atol=2e-2, rtol=2e-2)

    print("KERNEL_OK")
</pallas_src>

<mosaic_0001>
module attributes {stable_mosaic.version = 11 : i64} {
  func.func @_decoder_step_kernel(%arg0: i32, %arg1: memref<8xi32, #tpu.memory_space<smem>>, %arg2: memref<256x128xf32, #tpu.memory_space<any>>, %arg3: memref<1x8x128xf32, #tpu.memory_space<vmem>>, %arg4: memref<1x8x128xf32, #tpu.memory_space<vmem>>, %arg5: memref<1x128x512xbf16, #tpu.memory_space<vmem>>, %arg6: memref<1x128x512xbf16, #tpu.memory_space<vmem>>, %arg7: memref<1x1x512xf32, #tpu.memory_space<vmem>>, %arg8: memref<128x256xbf16, #tpu.memory_space<vmem>>, %arg9: memref<1x256xf32, #tpu.memory_space<vmem>>, %arg10: memref<8x256xf32, #tpu.memory_space<vmem>>, %arg11: memref<1x8x128xf32, #tpu.memory_space<vmem>>, %arg12: memref<1x8x128xf32, #tpu.memory_space<vmem>>, %arg13: memref<8x128xf32, #tpu.memory_space<vmem>>, %arg14: memref<8x!tpu.dma_semaphore, #tpu.memory_space<semaphore_mem>>) attributes {dimension_semantics = [#tpu.dimension_semantics<arbitrary>], iteration_bounds = array<i64: 2>, scalar_prefetch = 1 : i64, scratch_operands = 2 : i64, tpu.core_type = #tpu.core_type<tc>, window_params = [{}, {transform_indices = @transform_1, window_bounds = array<i64: 1, 8, 128>}, {transform_indices = @transform_2, window_bounds = array<i64: 1, 8, 128>}, {transform_indices = @transform_3, window_bounds = array<i64: 1, 128, 512>}, {transform_indices = @transform_4, window_bounds = array<i64: 1, 128, 512>}, {transform_indices = @transform_5, window_bounds = array<i64: 1, 1, 512>}, {pipeline_mode = #tpu.pipeline_mode<synchronous>, transform_indices = @transform_6, window_bounds = array<i64: 128, 256>}, {pipeline_mode = #tpu.pipeline_mode<synchronous>, transform_indices = @transform_7, window_bounds = array<i64: 1, 256>}, {pipeline_mode = #tpu.pipeline_mode<synchronous>, transform_indices = @transform_8, window_bounds = array<i64: 8, 256>}, {transform_indices = @transform_9, window_bounds = array<i64: 1, 8, 128>}, {transform_indices = @transform_10, window_bounds = array<i64: 1, 8, 128>}]} {
    %c0_i32 = arith.constant 0 : i32
    %0 = arith.cmpi eq, %arg0, %c0_i32 : i32
    %1 = arith.extui %0 : i1 to i32
    %c0_i32_0 = arith.constant 0 : i32
    %2 = arith.cmpi ne, %1, %c0_i32_0 : i32
    scf.if %2 {
      %c0_28 = arith.constant 0 : index
      %47 = memref.load %arg1[%c0_28] : memref<8xi32, #tpu.memory_space<smem>>
      %c0_i32_29 = arith.constant 0 : i32
      %48 = arith.maxsi %47, %c0_i32_29 : i32
      %c255_i32 = arith.constant 255 : i32
      %49 = arith.minsi %48, %c255_i32 : i32
      %c1 = arith.constant 1 : index
      %50 = memref.load %arg1[%c1] : memref<8xi32, #tpu.memory_space<smem>>
      %c0_i32_30 = arith.constant 0 : i32
      %51 = arith.maxsi %50, %c0_i32_30 : i32
      %c255_i32_31 = arith.constant 255 : i32
      %52 = arith.minsi %51, %c255_i32_31 : i32
      %c2 = arith.constant 2 : index
      %53 = memref.load %arg1[%c2] : memref<8xi32, #tpu.memory_space<smem>>
      %c0_i32_32 = arith.constant 0 : i32
      %54 = arith.maxsi %53, %c0_i32_32 : i32
      %c255_i32_33 = arith.constant 255 : i32
      %55 = arith.minsi %54, %c255_i32_33 : i32
      %c3 = arith.constant 3 : index
      %56 = memref.load %arg1[%c3] : memref<8xi32, #tpu.memory_space<smem>>
      %c0_i32_34 = arith.constant 0 : i32
      %57 = arith.maxsi %56, %c0_i32_34 : i32
      %c255_i32_35 = arith.constant 255 : i32
      %58 = arith.minsi %57, %c255_i32_35 : i32
      %c4 = arith.constant 4 : index
      %59 = memref.load %arg1[%c4] : memref<8xi32, #tpu.memory_space<smem>>
      %c0_i32_36 = arith.constant 0 : i32
      %60 = arith.maxsi %59, %c0_i32_36 : i32
      %c255_i32_37 = arith.constant 255 : i32
      %61 = arith.minsi %60, %c255_i32_37 : i32
      %c5 = arith.constant 5 : index
      %62 = memref.load %arg1[%c5] : memref<8xi32, #tpu.memory_space<smem>>
      %c0_i32_38 = arith.constant 0 : i32
      %63 = arith.maxsi %62, %c0_i32_38 : i32
      %c255_i32_39 = arith.constant 255 : i32
      %64 = arith.minsi %63, %c255_i32_39 : i32
      %c6 = arith.constant 6 : index
      %65 = memref.load %arg1[%c6] : memref<8xi32, #tpu.memory_space<smem>>
      %c0_i32_40 = arith.constant 0 : i32
      %66 = arith.maxsi %65, %c0_i32_40 : i32
      %c255_i32_41 = arith.constant 255 : i32
      %67 = arith.minsi %66, %c255_i32_41 : i32
      %c7 = arith.constant 7 : index
      %68 = memref.load %arg1[%c7] : memref<8xi32, #tpu.memory_space<smem>>
      %c0_i32_42 = arith.constant 0 : i32
      %69 = arith.maxsi %68, %c0_i32_42 : i32
      %c255_i32_43 = arith.constant 255 : i32
      %70 = arith.minsi %69, %c255_i32_43 : i32
      %c0_i32_44 = arith.constant 0 : i32
      %c0_i32_45 = arith.constant 0 : i32
      %71 = tpu.memref_slice %arg2[%49, %c0_i32_45] : memref<256x128xf32, #tpu.memory_space<any>> -> memref<1x128xf32, #tpu.memory_space<any>>
      %c0_i32_46 = arith.constant 0 : i32
      %c0_i32_47 = arith.constant 0 : i32
      %72 = tpu.memref_slice %arg13[%c0_i32_46, %c0_i32_47] : memref<8x128xf32, #tpu.memory_space<vmem>> -> memref<1x128xf32, #tpu.memory_space<vmem>>
      %73 = tpu.memref_slice %arg14[%c0_i32_44] : memref<8x!tpu.dma_semaphore, #tpu.memory_space<semaphore_mem>> -> memref<1x!tpu.dma_semaphore, #tpu.memory_space<semaphore_mem>>
      %74 = tpu.memref_squeeze %73 : memref<1x!tpu.dma_semaphore, #tpu.memory_space<semaphore_mem>> -> memref<!tpu.dma_semaphore, #tpu.memory_space<semaphore_mem>>
      tpu.enqueue_dma source(%71 : memref<1x128xf32, #tpu.memory_space<any>>) target(%72 : memref<1x128xf32, #tpu.memory_space<vmem>>) target_semaphore(%74 : memref<!tpu.dma_semaphore, #tpu.memory_space<semaphore_mem>>)
      %c1_i32_48 = arith.constant 1 : i32
      %c0_i32_49 = arith.constant 0 : i32
      %75 = tpu.memref_slice %arg2[%52, %c0_i32_49] : memref<256x128xf32, #tpu.memory_space<any>> -> memref<1x128xf32, #tpu.memory_space<any>>
      %c1_i32_50 = arith.constant 1 : i32
      %c0_i32_51 = arith.constant 0 : i32
      %76 = tpu.memref_slice %arg13[%c1_i32_50, %c0_i32_51] : memref<8x128xf32, #tpu.memory_space<vmem>> -> memref<1x128xf32, #tpu.memory_space<vmem>>
      %77 = tpu.memref_slice %arg14[%c1_i32_48] : memref<8x!tpu.dma_semaphore, #tpu.memory_space<semaphore_mem>> -> memref<1x!tpu.dma_semaphore, #tpu.memory_space<semaphore_mem>>
      %78 = tpu.memref_squeeze %77 : memref<1x!tpu.dma_semaphore, #tpu.memory_space<semaphore_mem>> -> memref<!tpu.dma_semaphore, #tpu.memory_space<semaphore_mem>>
      tpu.enqueue_dma source(%75 : memref<1x128xf32, #tpu.memory_space<any>>) target(%76 : memref<1x128xf32, #tpu.memory_space<vmem>>) target_semaphore(%78 : memref<!tpu.dma_semaphore, #tpu.memory_space<semaphore_mem>>)
      %c2_i32 = arith.constant 2 : i32
      %c0_i32_52 = arith.constant 0 : i32
      %79 = tpu.memref_slice %arg2[%55, %c0_i32_52] : memref<256x128xf32, #tpu.memory_space<any>> -> memref<1x128xf32, #tpu.memory_space<any>>
      %c2_i32_53 = arith.constant 2 : i32
      %c0_i32_54 = arith.constant 0 : i32
      %80 = tpu.memref_slice %arg13[%c2_i32_53, %c0_i32_54] : memref<8x128xf32, #tpu.memory_space<vmem>> -> memref<1x128xf32, #tpu.memory_space<vmem>>
      %81 = tpu.memref_slice %arg14[%c2_i32] : memref<8x!tpu.dma_semaphore, #tpu.memory_space<semaphore_mem>> -> memref<1x!tpu.dma_semaphore, #tpu.memory_space<semaphore_mem>>
      %82 = tpu.memref_squeeze %81 : memref<1x!tpu.dma_semaphore, #tpu.memory_space<semaphore_mem>> -> memref<!tpu.dma_semaphore, #tpu.memory_space<semaphore_mem>>
      tpu.enqueue_dma source(%79 : memref<1x128xf32, #tpu.memory_space<any>>) target(%80 : memref<1x128xf32, #tpu.memory_space<vmem>>) target_semaphore(%82 : memref<!tpu.dma_semaphore, #tpu.memory_space<semaphore_mem>>)
      %c3_i32 = arith.constant 3 : i32
      %c0_i32_55 = arith.constant 0 : i32
      %83 = tpu.memref_slice %arg2[%58, %c0_i32_55] : memref<256x128xf32, #tpu.memory_space<any>> -> memref<1x128xf32, #tpu.memory_space<any>>
      %c3_i32_56 = arith.constant 3 : i32
      %c0_i32_57 = arith.constant 0 : i32
      %84 = tpu.memref_slice %arg13[%c3_i32_56, %c0_i32_57] : memref<8x128xf32, #tpu.memory_space<vmem>> -> memref<1x128xf32, #tpu.memory_space<vmem>>
      %85 = tpu.memref_slice %arg14[%c3_i32] : memref<8x!tpu.dma_semaphore, #tpu.memory_space<semaphore_mem>> -> memref<1x!tpu.dma_semaphore, #tpu.memory_space<semaphore_mem>>
      %86 = tpu.memref_squeeze %85 : memref<1x!tpu.dma_semaphore, #tpu.memory_space<semaphore_mem>> -> memref<!tpu.dma_semaphore, #tpu.memory_space<semaphore_mem>>
      tpu.enqueue_dma source(%83 : memref<1x128xf32, #tpu.memory_space<any>>) target(%84 : memref<1x128xf32, #tpu.memory_space<vmem>>) target_semaphore(%86 : memref<!tpu.dma_semaphore, #tpu.memory_space<semaphore_mem>>)
      %c4_i32 = arith.constant 4 : i32
      %c0_i32_58 = arith.constant 0 : i32
      %87 = tpu.memref_slice %arg2[%61, %c0_i32_58] : memref<256x128xf32, #tpu.memory_space<any>> -> memref<1x128xf32, #tpu.memory_space<any>>
      %c4_i32_59 = arith.constant 4 : i32
      %c0_i32_60 = arith.constant 0 : i32
      %88 = tpu.memref_slice %arg13[%c4_i32_59, %c0_i32_60] : memref<8x128xf32, #tpu.memory_space<vmem>> -> memref<1x128xf32, #tpu.memory_space<vmem>>
      %89 = tpu.memref_slice %arg14[%c4_i32] : memref<8x!tpu.dma_semaphore, #tpu.memory_space<semaphore_mem>> -> memref<1x!tpu.dma_semaphore, #tpu.memory_space<semaphore_mem>>
      %90 = tpu.memref_squeeze %89 : memref<1x!tpu.dma_semaphore, #tpu.memory_space<semaphore_mem>> -> memref<!tpu.dma_semaphore, #tpu.memory_space<semaphore_mem>>
      tpu.enqueue_dma source(%87 : memref<1x128xf32, #tpu.memory_space<any>>) target(%88 : memref<1x128xf32, #tpu.memory_space<vmem>>) target_semaphore(%90 : memref<!tpu.dma_semaphore, #tpu.memory_space<semaphore_mem>>)
      %c5_i32 = arith.constant 5 : i32
      %c0_i32_61 = arith.constant 0 : i32
      %91 = tpu.memref_slice %arg2[%64, %c0_i32_61] : memref<256x128xf32, #tpu.memory_space<any>> -> memref<1x128xf32, #tpu.memory_space<any>>
      %c5_i32_62 = arith.constant 5 : i32
      %c0_i32_63 = arith.constant 0 : i32
      %92 = tpu.memref_slice %arg13[%c5_i32_62, %c0_i32_63] : memref<8x128xf32, #tpu.memory_space<vmem>> -> memref<1x128xf32, #tpu.memory_space<vmem>>
      %93 = tpu.memref_slice %arg14[%c5_i32] : memref<8x!tpu.dma_semaphore, #tpu.memory_space<semaphore_mem>> -> memref<1x!tpu.dma_semaphore, #tpu.memory_space<semaphore_mem>>
      %94 = tpu.memref_squeeze %93 : memref<1x!tpu.dma_semaphore, #tpu.memory_space<semaphore_mem>> -> memref<!tpu.dma_semaphore, #tpu.memory_space<semaphore_mem>>
      tpu.enqueue_dma source(%91 : memref<1x128xf32, #tpu.memory_space<any>>) target(%92 : memref<1x128xf32, #tpu.memory_space<vmem>>) target_semaphore(%94 : memref<!tpu.dma_semaphore, #tpu.memory_space<semaphore_mem>>)
      %c6_i32 = arith.constant 6 : i32
      %c0_i32_64 = arith.constant 0 : i32
      %95 = tpu.memref_slice %arg2[%67, %c0_i32_64] : memref<256x128xf32, #tpu.memory_space<any>> -> memref<1x128xf32, #tpu.memory_space<any>>
      %c6_i32_65 = arith.constant 6 : i32
      %c0_i32_66 = arith.constant 0 : i32
      %96 = tpu.memref_slice %arg13[%c6_i32_65, %c0_i32_66] : memref<8x128xf32, #tpu.memory_space<vmem>> -> memref<1x128xf32, #tpu.memory_space<vmem>>
      %97 = tpu.memref_slice %arg14[%c6_i32] : memref<8x!tpu.dma_semaphore, #tpu.memory_space<semaphore_mem>> -> memref<1x!tpu.dma_semaphore, #tpu.memory_space<semaphore_mem>>
      %98 = tpu.memref_squeeze %97 : memref<1x!tpu.dma_semaphore, #tpu.memory_space<semaphore_mem>> -> memref<!tpu.dma_semaphore, #tpu.memory_space<semaphore_mem>>
      tpu.enqueue_dma source(%95 : memref<1x128xf32, #tpu.memory_space<any>>) target(%96 : memref<1x128xf32, #tpu.memory_space<vmem>>) target_semaphore(%98 : memref<!tpu.dma_semaphore, #tpu.memory_space<semaphore_mem>>)
      %c7_i32 = arith.constant 7 : i32
      %c0_i32_67 = arith.constant 0 : i32
      %99 = tpu.memref_slice %arg2[%70, %c0_i32_67] : memref<256x128xf32, #tpu.memory_space<any>> -> memref<1x128xf32, #tpu.memory_space<any>>
      %c7_i32_68 = arith.constant 7 : i32
      %c0_i32_69 = arith.constant 0 : i32
      %100 = tpu.memref_slice %arg13[%c7_i32_68, %c0_i32_69] : memref<8x128xf32, #tpu.memory_space<vmem>> -> memref<1x128xf32, #tpu.memory_space<vmem>>
      %101 = tpu.memref_slice %arg14[%c7_i32] : memref<8x!tpu.dma_semaphore, #tpu.memory_space<semaphore_mem>> -> memref<1x!tpu.dma_semaphore, #tpu.memory_space<semaphore_mem>>
      %102 = tpu.memref_squeeze %101 : memref<1x!tpu.dma_semaphore, #tpu.memory_space<semaphore_mem>> -> memref<!tpu.dma_semaphore, #tpu.memory_space<semaphore_mem>>
      tpu.enqueue_dma source(%99 : memref<1x128xf32, #tpu.memory_space<any>>) target(%100 : memref<1x128xf32, #tpu.memory_space<vmem>>) target_semaphore(%102 : memref<!tpu.dma_semaphore, #tpu.memory_space<semaphore_mem>>)
      %c0_i32_70 = arith.constant 0 : i32
      %c0_i32_71 = arith.constant 0 : i32
      %103 = tpu.memref_slice %arg2[%49, %c0_i32_71] : memref<256x128xf32, #tpu.memory_space<any>> -> memref<1x128xf32, #tpu.memory_space<any>>
      %c0_i32_72 = arith.constant 0 : i32
      %c0_i32_73 = arith.constant 0 : i32
      %104 = tpu.memref_slice %arg13[%c0_i32_72, %c0_i32_73] : memref<8x128xf32, #tpu.memory_space<vmem>> -> memref<1x128xf32, #tpu.memory_space<vmem>>
      %105 = tpu.memref_slice %arg14[%c0_i32_70] : memref<8x!tpu.dma_semaphore, #tpu.memory_space<semaphore_mem>> -> memref<1x!tpu.dma_semaphore, #tpu.memory_space<semaphore_mem>>
      %106 = tpu.memref_squeeze %105 : memref<1x!tpu.dma_semaphore, #tpu.memory_space<semaphore_mem>> -> memref<!tpu.dma_semaphore, #tpu.memory_space<semaphore_mem>>
      tpu.wait_dma2 semaphore(%106 : memref<!tpu.dma_semaphore, #tpu.memory_space<semaphore_mem>>) src(%103 : memref<1x128xf32, #tpu.memory_space<any>>) dst(%104 : memref<1x128xf32, #tpu.memory_space<vmem>>)
      %c1_i32_74 = arith.constant 1 : i32
      %c0_i32_75 = arith.constant 0 : i32
      %107 = tpu.memref_slice %arg2[%52, %c0_i32_75] : memref<256x128xf32, #tpu.memory_space<any>> -> memref<1x128xf32, #tpu.memory_space<any>>
      %c1_i32_76 = arith.constant 1 : i32
      %c0_i32_77 = arith.constant 0 : i32
      %108 = tpu.memref_slice %arg13[%c1_i32_76, %c0_i32_77] : memref<8x128xf32, #tpu.memory_space<vmem>> -> memref<1x128xf32, #tpu.memory_space<vmem>>
      %109 = tpu.memref_slice %arg14[%c1_i32_74] : memref<8x!tpu.dma_semaphore, #tpu.memory_space<semaphore_mem>> -> memref<1x!tpu.dma_semaphore, #tpu.memory_space<semaphore_mem>>
      %110 = tpu.memref_squeeze %109 : memref<1x!tpu.dma_semaphore, #tpu.memory_space<semaphore_mem>> -> memref<!tpu.dma_semaphore, #tpu.memory_space<semaphore_mem>>
      tpu.wait_dma2 semaphore(%110 : memref<!tpu.dma_semaphore, #tpu.memory_space<semaphore_mem>>) src(%107 : memref<1x128xf32, #tpu.memory_space<any>>) dst(%108 : memref<1x128xf32, #tpu.memory_space<vmem>>)
      %c2_i32_78 = arith.constant 2 : i32
      %c0_i32_79 = arith.constant 0 : i32
      %111 = tpu.memref_slice %arg2[%55, %c0_i32_79] : memref<256x128xf32, #tpu.memory_space<any>> -> memref<1x128xf32, #tpu.memory_space<any>>
      %c2_i32_80 = arith.constant 2 : i32
      %c0_i32_81 = arith.constant 0 : i32
      %112 = tpu.memref_slice %arg13[%c2_i32_80, %c0_i32_81] : memref<8x128xf32, #tpu.memory_space<vmem>> -> memref<1x128xf32, #tpu.memory_space<vmem>>
      %113 = tpu.memref_slice %arg14[%c2_i32_78] : memref<8x!tpu.dma_semaphore, #tpu.memory_space<semaphore_mem>> -> memref<1x!tpu.dma_semaphore, #tpu.memory_space<semaphore_mem>>
      %114 = tpu.memref_squeeze %113 : memref<1x!tpu.dma_semaphore, #tpu.memory_space<semaphore_mem>> -> memref<!tpu.dma_semaphore, #tpu.memory_space<semaphore_mem>>
      tpu.wait_dma2 semaphore(%114 : memref<!tpu.dma_semaphore, #tpu.memory_space<semaphore_mem>>) src(%111 : memref<1x128xf32, #tpu.memory_space<any>>) dst(%112 : memref<1x128xf32, #tpu.memory_space<vmem>>)
      %c3_i32_82 = arith.constant 3 : i32
      %c0_i32_83 = arith.constant 0 : i32
      %115 = tpu.memref_slice %arg2[%58, %c0_i32_83] : memref<256x128xf32, #tpu.memory_space<any>> -> memref<1x128xf32, #tpu.memory_space<any>>
      %c3_i32_84 = arith.constant 3 : i32
      %c0_i32_85 = arith.constant 0 : i32
      %116 = tpu.memref_slice %arg13[%c3_i32_84, %c0_i32_85] : memref<8x128xf32, #tpu.memory_space<vmem>> -> memref<1x128xf32, #tpu.memory_space<vmem>>
      %117 = tpu.memref_slice %arg14[%c3_i32_82] : memref<8x!tpu.dma_semaphore, #tpu.memory_space<semaphore_mem>> -> memref<1x!tpu.dma_semaphore, #tpu.memory_space<semaphore_mem>>
      %118 = tpu.memref_squeeze %117 : memref<1x!tpu.dma_semaphore, #tpu.memory_space<semaphore_mem>> -> memref<!tpu.dma_semaphore, #tpu.memory_space<semaphore_mem>>
      tpu.wait_dma2 semaphore(%118 : memref<!tpu.dma_semaphore, #tpu.memory_space<semaphore_mem>>) src(%115 : memref<1x128xf32, #tpu.memory_space<any>>) dst(%116 : memref<1x128xf32, #tpu.memory_space<vmem>>)
      %c4_i32_86 = arith.constant 4 : i32
      %c0_i32_87 = arith.constant 0 : i32
      %119 = tpu.memref_slice %arg2[%61, %c0_i32_87] : memref<256x128xf32, #tpu.memory_space<any>> -> memref<1x128xf32, #tpu.memory_space<any>>
      %c4_i32_88 = arith.constant 4 : i32
      %c0_i32_89 = arith.constant 0 : i32
      %120 = tpu.memref_slice %arg13[%c4_i32_88, %c0_i32_89] : memref<8x128xf32, #tpu.memory_space<vmem>> -> memref<1x128xf32, #tpu.memory_space<vmem>>
      %121 = tpu.memref_slice %arg14[%c4_i32_86] : memref<8x!tpu.dma_semaphore, #tpu.memory_space<semaphore_mem>> -> memref<1x!tpu.dma_semaphore, #tpu.memory_space<semaphore_mem>>
      %122 = tpu.memref_squeeze %121 : memref<1x!tpu.dma_semaphore, #tpu.memory_space<semaphore_mem>> -> memref<!tpu.dma_semaphore, #tpu.memory_space<semaphore_mem>>
      tpu.wait_dma2 semaphore(%122 : memref<!tpu.dma_semaphore, #tpu.memory_space<semaphore_mem>>) src(%119 : memref<1x128xf32, #tpu.memory_space<any>>) dst(%120 : memref<1x128xf32, #tpu.memory_space<vmem>>)
      %c5_i32_90 = arith.constant 5 : i32
      %c0_i32_91 = arith.constant 0 : i32
      %123 = tpu.memref_slice %arg2[%64, %c0_i32_91] : memref<256x128xf32, #tpu.memory_space<any>> -> memref<1x128xf32, #tpu.memory_space<any>>
      %c5_i32_92 = arith.constant 5 : i32
      %c0_i32_93 = arith.constant 0 : i32
      %124 = tpu.memref_slice %arg13[%c5_i32_92, %c0_i32_93] : memref<8x128xf32, #tpu.memory_space<vmem>> -> memref<1x128xf32, #tpu.memory_space<vmem>>
      %125 = tpu.memref_slice %arg14[%c5_i32_90] : memref<8x!tpu.dma_semaphore, #tpu.memory_space<semaphore_mem>> -> memref<1x!tpu.dma_semaphore, #tpu.memory_space<semaphore_mem>>
      %126 = tpu.memref_squeeze %125 : memref<1x!tpu.dma_semaphore, #tpu.memory_space<semaphore_mem>> -> memref<!tpu.dma_semaphore, #tpu.memory_space<semaphore_mem>>
      tpu.wait_dma2 semaphore(%126 : memref<!tpu.dma_semaphore, #tpu.memory_space<semaphore_mem>>) src(%123 : memref<1x128xf32, #tpu.memory_space<any>>) dst(%124 : memref<1x128xf32, #tpu.memory_space<vmem>>)
      %c6_i32_94 = arith.constant 6 : i32
      %c0_i32_95 = arith.constant 0 : i32
      %127 = tpu.memref_slice %arg2[%67, %c0_i32_95] : memref<256x128xf32, #tpu.memory_space<any>> -> memref<1x128xf32, #tpu.memory_space<any>>
      %c6_i32_96 = arith.constant 6 : i32
      %c0_i32_97 = arith.constant 0 : i32
      %128 = tpu.memref_slice %arg13[%c6_i32_96, %c0_i32_97] : memref<8x128xf32, #tpu.memory_space<vmem>> -> memref<1x128xf32, #tpu.memory_space<vmem>>
      %129 = tpu.memref_slice %arg14[%c6_i32_94] : memref<8x!tpu.dma_semaphore, #tpu.memory_space<semaphore_mem>> -> memref<1x!tpu.dma_semaphore, #tpu.memory_space<semaphore_mem>>
      %130 = tpu.memref_squeeze %129 : memref<1x!tpu.dma_semaphore, #tpu.memory_space<semaphore_mem>> -> memref<!tpu.dma_semaphore, #tpu.memory_space<semaphore_mem>>
      tpu.wait_dma2 semaphore(%130 : memref<!tpu.dma_semaphore, #tpu.memory_space<semaphore_mem>>) src(%127 : memref<1x128xf32, #tpu.memory_space<any>>) dst(%128 : memref<1x128xf32, #tpu.memory_space<vmem>>)
      %c7_i32_98 = arith.constant 7 : i32
      %c0_i32_99 = arith.constant 0 : i32
      %131 = tpu.memref_slice %arg2[%70, %c0_i32_99] : memref<256x128xf32, #tpu.memory_space<any>> -> memref<1x128xf32, #tpu.memory_space<any>>
      %c7_i32_100 = arith.constant 7 : i32
      %c0_i32_101 = arith.constant 0 : i32
      %132 = tpu.memref_slice %arg13[%c7_i32_100, %c0_i32_101] : memref<8x128xf32, #tpu.memory_space<vmem>> -> memref<1x128xf32, #tpu.memory_space<vmem>>
      %133 = tpu.memref_slice %arg14[%c7_i32_98] : memref<8x!tpu.dma_semaphore, #tpu.memory_space<semaphore_mem>> -> memref<1x!tpu.dma_semaphore, #tpu.memory_space<semaphore_mem>>
      %134 = tpu.memref_squeeze %133 : memref<1x!tpu.dma_semaphore, #tpu.memory_space<semaphore_mem>> -> memref<!tpu.dma_semaphore, #tpu.memory_space<semaphore_mem>>
      tpu.wait_dma2 semaphore(%134 : memref<!tpu.dma_semaphore, #tpu.memory_space<semaphore_mem>>) src(%131 : memref<1x128xf32, #tpu.memory_space<any>>) dst(%132 : memref<1x128xf32, #tpu.memory_space<vmem>>)
    } else {
    }
    %c0 = arith.constant 0 : index
    %c0_1 = arith.constant 0 : index
    %3 = vector.load %arg13[%c0, %c0_1] : memref<8x128xf32, #tpu.memory_space<vmem>>, vector<8x128xf32>
    %4 = arith.truncf %3 : vector<8x128xf32> to vector<8x128xbf16>
    %c0_2 = arith.constant 0 : index
    %c0_3 = arith.constant 0 : index
    %c0_4 = arith.constant 0 : index
    %5 = vector.load %arg3[%c0_2, %c0_3, %c0_4] : memref<1x8x128xf32, #tpu.memory_space<vmem>>, vector<1x8x128xf32>
    %6 = vector.shape_cast %5 : vector<1x8x128xf32> to vector<8x128xf32>
    %c0_5 = arith.constant 0 : index
    %c0_6 = arith.constant 0 : index
    %c0_7 = arith.constant 0 : index
    %7 = vector.load %arg4[%c0_5, %c0_6, %c0_7] : memref<1x8x128xf32, #tpu.memory_space<vmem>>, vector<1x8x128xf32>
    %8 = vector.shape_cast %7 : vector<1x8x128xf32> to vector<8x128xf32>
    %c0_8 = arith.constant 0 : index
    %c0_9 = arith.constant 0 : index
    %c0_10 = arith.constant 0 : index
    %9 = vector.load %arg5[%c0_8, %c0_9, %c0_10] : memref<1x128x512xbf16, #tpu.memory_space<vmem>>, vector<1x128x512xbf16>
    %10 = vector.shape_cast %9 : vector<1x128x512xbf16> to vector<128x512xbf16>
    %cst = arith.constant dense<0.000000e+00> : vector<8x512xf32>
    %11 = tpu.matmul %4, %10, %cst {dimension_numbers = #tpu.dot_dimension_numbers<[1], [0], [0], [1], [0, 0, 1, 1], [], []>} : vector<8x128xbf16>, vector<128x512xbf16>, vector<8x512xf32> -> vector<8x512xf32>
    %12 = arith.truncf %6 : vector<8x128xf32> to vector<8x128xbf16>
    %c0_11 = arith.constant 0 : index
    %c0_12 = arith.constant 0 : index
    %c0_13 = arith.constant 0 : index
    %13 = vector.load %arg6[%c0_11, %c0_12, %c0_13] : memref<1x128x512xbf16, #tpu.memory_space<vmem>>, vector<1x128x512xbf16>
    %14 = vector.shape_cast %13 : vector<1x128x512xbf16> to vector<128x512xbf16>
    %cst_14 = arith.constant dense<0.000000e+00> : vector<8x512xf32>
    %15 = tpu.matmul %12, %14, %cst_14 {dimension_numbers = #tpu.dot_dimension_numbers<[1], [0], [0], [1], [0, 0, 1, 1], [], []>} : vector<8x128xbf16>, vector<128x512xbf16>, vector<8x512xf32> -> vector<8x512xf32>
    %16 = arith.addf %11, %15 : vector<8x512xf32>
    %c0_15 = arith.constant 0 : index
    %c0_16 = arith.constant 0 : index
    %c0_17 = arith.constant 0 : index
    %17 = vector.load %arg7[%c0_15, %c0_16, %c0_17] : memref<1x1x512xf32, #tpu.memory_space<vmem>>, vector<1x1x512xf32>
    %18 = vector.shape_cast %17 : vector<1x1x512xf32> to vector<1x512xf32>
    %19 = vector.broadcast %18 : vector<1x512xf32> to vector<8x512xf32>
    %20 = arith.addf %16, %19 : vector<8x512xf32>
    %21 = vector.extract_strided_slice %20 {offsets = [0, 0], sizes = [8, 384], strides = [1, 1]} : vector<8x512xf32> to vector<8x384xf32>
    %22 = arith.negf %21 : vector<8x384xf32>
    %23 = math.exp %22 : vector<8x384xf32>
    %cst_18 = arith.constant 1.000000e+00 : f32
    %24 = vector.broadcast %cst_18 : f32 to vector<8x384xf32>
    %25 = arith.addf %24, %23 : vector<8x384xf32>
    %26 = arith.divf %24, %25 : vector<8x384xf32>
    %27 = vector.extract_strided_slice %26 {offsets = [0, 0], sizes = [8, 128], strides = [1, 1]} : vector<8x384xf32> to vector<8x128xf32>
    %28 = vector.extract_strided_slice %26 {offsets = [0, 128], sizes = [8, 128], strides = [1, 1]} : vector<8x384xf32> to vector<8x128xf32>
    %29 = vector.extract_strided_slice %26 {offsets = [0, 256], sizes = [8, 128], strides = [1, 1]} : vector<8x384xf32> to vector<8x128xf32>
    %30 = vector.extract_strided_slice %20 {offsets = [0, 384], sizes = [8, 128], strides = [1, 1]} : vector<8x512xf32> to vector<8x128xf32>
    %31 = math.tanh %30 : vector<8x128xf32>
    %32 = arith.mulf %28, %8 : vector<8x128xf32>
    %33 = arith.mulf %27, %31 : vector<8x128xf32>
    %34 = arith.addf %32, %33 : vector<8x128xf32>
    %35 = math.tanh %34 : vector<8x128xf32>
    %36 = arith.mulf %29, %35 : vector<8x128xf32>
    %c0_19 = arith.constant 0 : index
    %c0_20 = arith.constant 0 : index
    %c0_21 = arith.constant 0 : index
    %37 = vector.load %arg11[%c0_19, %c0_20, %c0_21] : memref<1x8x128xf32, #tpu.memory_space<vmem>>, vector<1x8x128xf32>
    %38 = vector.shape_cast %37 : vector<1x8x128xf32> to vector<8x128xf32>
    %39 = vector.shape_cast %36 : vector<8x128xf32> to vector<1x8x128xf32>
    tpu.vector_store %arg11[%c0_19, %c0_20, %c0_21], %39 {strides = array<i32>} : memref<1x8x128xf32, #tpu.memory_space<vmem>>, vector<1x8x128xf32>,
    %c0_22 = arith.constant 0 : index
    %c0_23 = arith.constant 0 : index
    %c0_24 = arith.constant 0 : index
    %40 = vector.load %arg12[%c0_22, %c0_23, %c0_24] : memref<1x8x128xf32, #tpu.memory_space<vmem>>, vector<1x8x128xf32>
    %41 = vector.shape_cast %40 : vector<1x8x128xf32> to vector<8x128xf32>
    %42 = vector.shape_cast %34 : vector<8x128xf32> to vector<1x8x128xf32>
    tpu.vector_store %arg12[%c0_22, %c0_23, %c0_24], %42 {strides = array<i32>} : memref<1x8x128xf32, #tpu.memory_space<vmem>>, vector<1x8x128xf32>,
    %c0_25 = arith.constant 0 : index
    %c0_26 = arith.constant 0 : index
    %43 = vector.load %arg13[%c0_25, %c0_26] : memref<8x128xf32, #tpu.memory_space<vmem>>, vector<8x128xf32>
    tpu.vector_store %arg13[%c0_25, %c0_26], %36 {strides = array<i32>} : memref<8x128xf32, #tpu.memory_space<vmem>>, vector<8x128xf32>,
    %c1_i32 = arith.constant 1 : i32
    %44 = arith.cmpi eq, %arg0, %c1_i32 : i32
    %45 = arith.extui %44 : i1 to i32
    %c0_i32_27 = arith.constant 0 : i32
    %46 = arith.cmpi ne, %45, %c0_i32_27 : i32
    scf.if %46 {
      %47 = arith.truncf %36 : vector<8x128xf32> to vector<8x128xbf16>
      %c0_28 = arith.constant 0 : index
      %c0_29 = arith.constant 0 : index
      %48 = vector.load %arg8[%c0_28, %c0_29] : memref<128x256xbf16, #tpu.memory_space<vmem>>, vector<128x256xbf16>
      %cst_30 = arith.constant dense<0.000000e+00> : vector<8x256xf32>
      %49 = tpu.matmul %47, %48, %cst_30 {dimension_numbers = #tpu.dot_dimension_numbers<[1], [0], [0], [1], [0, 0, 1, 1], [], []>} : vector<8x128xbf16>, vector<128x256xbf16>, vector<8x256xf32> -> vector<8x256xf32>
      %c0_31 = arith.constant 0 : index
      %c0_32 = arith.constant 0 : index
      %50 = vector.load %arg9[%c0_31, %c0_32] : memref<1x256xf32, #tpu.memory_space<vmem>>, vector<1x256xf32>
      %51 = vector.broadcast %50 : vector<1x256xf32> to vector<8x256xf32>
      %52 = arith.addf %49, %51 : vector<8x256xf32>
      %c0_33 = arith.constant 0 : index
      %c0_34 = arith.constant 0 : index
      %53 = vector.load %arg10[%c0_33, %c0_34] : memref<8x256xf32, #tpu.memory_space<vmem>>, vector<8x256xf32>
      tpu.vector_store %arg10[%c0_33, %c0_34], %52 {strides = array<i32>} : memref<8x256xf32, #tpu.memory_space<vmem>>, vector<8x256xf32>,
    } else {
    }
    return
  }
  func.func @transform_1(%arg0: i32, %arg1: memref<8xi32, #tpu.memory_space<smem>>) -> (i32, i32, i32) {
    %c0_i32 = arith.constant 0 : i32
    %c0_i32_0 = arith.constant 0 : i32
    %c0_i32_1 = arith.constant 0 : i32
    return %arg0, %c0_i32, %c0_i32_0 : i32, i32, i32
  }
  func.func @transform_2(%arg0: i32, %arg1: memref<8xi32, #tpu.memory_space<smem>>) -> (i32, i32, i32) {
    %c0_i32 = arith.constant 0 : i32
    %c0_i32_0 = arith.constant 0 : i32
    %c0_i32_1 = arith.constant 0 : i32
    return %arg0, %c0_i32, %c0_i32_0 : i32, i32, i32
  }
  func.func @transform_3(%arg0: i32, %arg1: memref<8xi32, #tpu.memory_space<smem>>) -> (i32, i32, i32) {
    %c0_i32 = arith.constant 0 : i32
    %c0_i32_0 = arith.constant 0 : i32
    %c0_i32_1 = arith.constant 0 : i32
    return %arg0, %c0_i32, %c0_i32_0 : i32, i32, i32
  }
  func.func @transform_4(%arg0: i32, %arg1: memref<8xi32, #tpu.memory_space<smem>>) -> (i32, i32, i32) {
    %c0_i32 = arith.constant 0 : i32
    %c0_i32_0 = arith.constant 0 : i32
    %c0_i32_1 = arith.constant 0 : i32
    return %arg0, %c0_i32, %c0_i32_0 : i32, i32, i32
  }
  func.func @transform_5(%arg0: i32, %arg1: memref<8xi32, #tpu.memory_space<smem>>) -> (i32, i32, i32) {
    %c0_i32 = arith.constant 0 : i32
    %c0_i32_0 = arith.constant 0 : i32
    %c0_i32_1 = arith.constant 0 : i32
    return %arg0, %c0_i32, %c0_i32_0 : i32, i32, i32
  }
  func.func @transform_6(%arg0: i32, %arg1: memref<8xi32, #tpu.memory_space<smem>>) -> (i32, i32) {
    %c0_i32 = arith.constant 0 : i32
    %c0_i32_0 = arith.constant 0 : i32
    %c0_i32_1 = arith.constant 0 : i32
    return %c0_i32, %c0_i32_0 : i32, i32
  }
  func.func @transform_7(%arg0: i32, %arg1: memref<8xi32, #tpu.memory_space<smem>>) -> (i32, i32) {
    %c0_i32 = arith.constant 0 : i32
    %c0_i32_0 = arith.constant 0 : i32
    %c0_i32_1 = arith.constant 0 : i32
    return %c0_i32, %c0_i32_0 : i32, i32
  }
  func.func @transform_8(%arg0: i32, %arg1: memref<8xi32, #tpu.memory_space<smem>>) -> (i32, i32) {
    %c0_i32 = arith.constant 0 : i32
    %c0_i32_0 = arith.constant 0 : i32
    %c0_i32_1 = arith.constant 0 : i32
    return %c0_i32, %c0_i32_0 : i32, i32
  }
  func.func @transform_9(%arg0: i32, %arg1: memref<8xi32, #tpu.memory_space<smem>>) -> (i32, i32, i32) {
    %c0_i32 = arith.constant 0 : i32
    %c0_i32_0 = arith.constant 0 : i32
    %c0_i32_1 = arith.constant 0 : i32
    return %arg0, %c0_i32, %c0_i32_0 : i32, i32, i32
  }
  func.func @transform_10(%arg0: i32, %arg1: memref<8xi32, #tpu.memory_space<smem>>) -> (i32, i32, i32) {
    %c0_i32 = arith.constant 0 : i32
    %c0_i32_0 = arith.constant 0 : i32
    %c0_i32_1 = arith.constant 0 : i32
    return %arg0, %c0_i32, %c0_i32_0 : i32, i32, i32
  }
}

</mosaic_0001>

<llo_original>
// kernel: decoder_forward.1
$region0: #{decoder_forward.1}
  #allocation0 [shape = 'u32[]', space=smem, size = 0x4, offset = 0x4, fixed_abs, tag = 'smem constant byte address 0x4 - core index']
  #allocation1 [shape = 'u32[72,128]{1,0:T(1,128)}', space=vmem, size = 0x9000, scoped, tag = 'internal scratch']
  #allocation2 [shape = 'f32[8,128]{1,0:T(8,128)}', space=vmem, size = 0x1000, scoped, tag = 'scratch operand']
  #allocation3 [shape = 's32[8]{0}', space=sflag, size = 0x20, scoped, tag = 'scratch operand']
  #allocation4 [shape = 's32[1]{0}', space=sflag, size = 0x4, scoped, tag = 'scoped memory for decoder_forward.1']
  #allocation5 [shape = 'u8[512]{0}', space=smem, size = 0x200, scoped, tag = 'prefetched SMEM operand 0']
  #allocation22 [shape = 's32[]', space=sflag, size = 0x4, offset = 0, fixed_abs, tag = 'sflag constant byte address 0x0 - dummy sync flag']
  #allocation23 [shape = 's32[]', space=sflag, size = 0x4, offset = 0, fixed_abs, tag = 'sflag constant byte address 0x0 - dummy sync flag']
  #allocation24 [shape = 'u32[]', space=smem, size = 0x4, offset = 0x44, fixed_abs, tag = 'smem constant byte address 0x44 - assertion arg 0']
  #allocation25 [shape = 'u32[]', space=smem, size = 0x4, offset = 0x48, fixed_abs, tag = 'smem constant byte address 0x48 - assertion arg 1']
  #allocation26 [shape = 's32[]', space=sflag, size = 0x4, offset = 0, fixed_abs, tag = 'sflag constant byte address 0x0 - dummy sync flag']
  #allocation27 [shape = 's32[]', space=sflag, size = 0x4, offset = 0, fixed_abs, tag = 'sflag constant byte address 0x0 - dummy sync flag']
  #allocation28 [shape = 's32[]', space=sflag, size = 0x4, offset = 0, fixed_abs, tag = 'sflag constant byte address 0x0 - dummy sync flag']
  #allocation29 [shape = 's32[]', space=sflag, size = 0x4, offset = 0, fixed_abs, tag = 'sflag constant byte address 0x0 - dummy sync flag']
  #allocation30 [shape = 's32[]', space=sflag, size = 0x4, offset = 0, fixed_abs, tag = 'sflag constant byte address 0x0 - dummy sync flag']
  #allocation31 [shape = 's32[]', space=sflag, size = 0x4, offset = 0, fixed_abs, tag = 'sflag constant byte address 0x0 - dummy sync flag']
  #allocation32 [shape = 's32[]', space=sflag, size = 0x4, offset = 0, fixed_abs, tag = 'sflag constant byte address 0x0 - dummy sync flag']
  #allocation33 [shape = 's32[]', space=sflag, size = 0x4, offset = 0, fixed_abs, tag = 'sflag constant byte address 0x0 - dummy sync flag']
  #allocation34 [shape = 's32[]', space=sflag, size = 0x4, offset = 0, fixed_abs, tag = 'sflag constant byte address 0x0 - dummy sync flag']
  #allocation35 [shape = 's32[]', space=sflag, size = 0x4, offset = 0, fixed_abs, tag = 'sflag constant byte address 0x0 - dummy sync flag']
  #allocation36 [shape = 's32[]', space=sflag, size = 0x4, offset = 0, fixed_abs, tag = 'sflag constant byte address 0x0 - dummy sync flag']
  #allocation37 [shape = 's32[]', space=sflag, size = 0x4, offset = 0, fixed_abs, tag = 'sflag constant byte address 0x0 - dummy sync flag']
  #allocation38 [shape = 's32[]', space=sflag, size = 0x4, offset = 0, fixed_abs, tag = 'sflag constant byte address 0x0 - dummy sync flag']
  #allocation39 [shape = 's32[]', space=sflag, size = 0x4, offset = 0, fixed_abs, tag = 'sflag constant byte address 0x0 - dummy sync flag']
  %s0 = inlined_call_operand.vmem [shape: s32[8], index: 0, kind: input, shape index: {}]
  %s1 = inlined_call_operand.hbm [shape: f32[256,128], index: 1, kind: input, shape index: {}]
  %s2 = inlined_call_operand.hbm [shape: f32[2,8,128], index: 2, kind: input, shape index: {}]
  %s3 = inlined_call_operand.hbm [shape: f32[2,8,128], index: 3, kind: input, shape index: {}]
  %s4 = inlined_call_operand.hbm [shape: bf16[2,128,512], index: 4, kind: input, shape index: {}]
  %s5 = inlined_call_operand.hbm [shape: bf16[2,128,512], index: 5, kind: input, shape index: {}]
  %s6 = inlined_call_operand.hbm [shape: f32[2,1,512], index: 6, kind: input, shape index: {}]
  %s7 = inlined_call_operand.hbm [shape: bf16[128,256], index: 7, kind: input, shape index: {}]
  %s8 = inlined_call_operand.hbm [shape: f32[1,256], index: 8, kind: input, shape index: {}]
  %s9 = inlined_call_operand.hbm [shape: f32[8,256], index: 9, kind: output, shape index: {0}]
  %s10 = inlined_call_operand.hbm [shape: f32[2,8,128], index: 10, kind: output, shape index: {1}]
  %s11 = inlined_call_operand.hbm [shape: f32[2,8,128], index: 11, kind: output, shape index: {2}]
  %12 = xla_tuple %s9, %s10, %s11
  %s13 = sld [smem:[#allocation0]]
  $region145: #{decoder_forward.1} parent=0
    _
  %s15 = ssub.s32 1, %s13
  %s16 = scalar_select 0, %s15, %s13
  %s18 = sshll.u32 %s0, 4
  %s19 = int_to_ptr.vmem [resolvable:$true] %s18
  %21 = dma.vmem_to_smem %s19, 16, [#allocation5], [#allocation4]
  %23 = dma.done [#allocation4], 16
  %24 = sfence
  $region1: #{decoder_forward.1} parent=0
    #allocation6 [shape = 'u8[8192]{0}', space=vmem, size = 0x2000, scoped, tag = 'input window, operand 2']
    #allocation7 [shape = 's32[2]{0}', space=sflag, size = 0x8, scoped, tag = 'scoped memory for decoder_forward.1']
    #allocation8 [shape = 's32[2]{0}', space=sflag, size = 0x8, scoped, tag = 'scoped memory for decoder_forward.1']
    #allocation9 [shape = 'u8[8192]{0}', space=vmem, size = 0x2000, scoped, tag = 'input window, operand 3']
    #allocation10 [shape = 's32[2]{0}', space=sflag, size = 0x8, scoped, tag = 'scoped memory for decoder_forward.1']
    #allocation11 [shape = 'u8[262144]{0}', space=vmem, size = 0x40000, scoped, tag = 'input window, operand 4']
    #allocation12 [shape = 'u8[262144]{0}', space=vmem, size = 0x40000, scoped, tag = 'input window, operand 5']
    #allocation13 [shape = 's32[2]{0}', space=sflag, size = 0x8, scoped, tag = 'scoped memory for decoder_forward.1']
    #allocation14 [shape = 'u8[4096]{0}', space=vmem, size = 0x1000, scoped, tag = 'input window, operand 6']
    #allocation15 [shape = 'u8[65536]{0}', space=vmem, size = 0x10000, scoped, tag = 'input window, operand 7, single buffered']
    #allocation16 [shape = 's32[1]{0}', space=sflag, size = 0x4, scoped, tag = 'scoped memory for decoder_forward.1']
    #allocation17 [shape = 'u8[1024]{0}', space=vmem, size = 0x400, scoped, tag = 'input window, operand 8, single buffered']
    #allocation18 [shape = 'u8[8192]{0}', space=vmem, size = 0x2000, scoped, tag = 'output window, operand 0, single buffered']
    #allocation19 [shape = 'u8[8192]{0}', space=vmem, size = 0x2000, scoped, tag = 'output window, operand 1']
    #allocation20 [shape = 's32[2]{0}', space=sflag, size = 0x8, scoped, tag = 'scoped memory for decoder_forward.1']
    #allocation21 [shape = 'u8[8192]{0}', space=vmem, size = 0x2000, scoped, tag = 'output window, operand 2']
    %25 = vsyncpa [#allocation7], 0
    %s26 = scalar_lea.sflag [#allocation7], 1
    %27 = vsyncpa %s26, 0
    %28 = vsyncpa [#allocation10], 0
    %s29 = scalar_lea.sflag [#allocation10], 1
    %30 = vsyncpa %s29, 0
    %31 = vsyncpa [#allocation13], 0
    %s32 = scalar_lea.sflag [#allocation13], 1
    %33 = vsyncpa %s32, 0
    %34 = vsyncpa [#allocation16], 0
    %35 = vsyncpa [#allocation8], 0
    %36 = vsyncpa [#allocation20], 0
    %s37 = scalar_lea.sflag [#allocation20], 1
    %38 = vsyncpa %s37, 0
    loop: start=0, step=1, limit=4
    $region2: #{decoder_forward.1} parent=1 // loop_pre_header
      _
    $region3: #{decoder_forward.1} parent=1 // loop_header
      %s40 = sphi 0, %s44
      %p41 = scmp.ge.s32.totalorder %s40, 4
      %s50 = sphi 0, %s52
      %s53 = sphi 0, %s50
      %s54 = sphi 0, %s53
      %s70 = sphi 0, %s54
      %s76 = sphi 0, %s78
      %s79 = sphi 0, %s76
      %s80 = sphi 0, %s79
      %s96 = sphi 0, %s80
      %s102 = sphi 0, %s104
      %s105 = sphi 0, %s102
      %s106 = sphi 0, %s105
      %s122 = sphi 0, %s106
      %s128 = sphi 0, %s130
      %s131 = sphi 0, %s128
      %s132 = sphi 0, %s131
      %s148 = sphi 0, %s132
      %s154 = sphi 0, %s156
      %s157 = sphi 0, %s154
      %s158 = sphi 0, %s157
      %s174 = sphi 0, %s158
      %s178 = sphi 0, %s178
      %s180 = sphi 0, %s178
      %s181 = sphi 0, %s180
      %s195 = sphi 0, %s181
      %s199 = sphi 0, %s199
      %s201 = sphi 0, %s199
      %s202 = sphi 0, %s201
      %s216 = sphi 0, %s202
      %s220 = sphi 0, %s220
      %s222 = sphi 0, %s220
      %s223 = sphi 0, %s222
      %s237 = sphi 0, %s223
      %s243 = sphi 0, %s245
      %s246 = sphi 0, %s243
      %s247 = sphi 0, %s246
      %s263 = sphi 0, %s247
      %s269 = sphi 0, %s271
      %s272 = sphi 0, %s269
      %s273 = sphi 0, %s272
      %s289 = sphi 0, %s273
    $region4: #{decoder_forward.1} parent=1 // loop_header_branch
      %43 = sbr.rel (%p41) target = $region8
    $region5: #{decoder_forward.1} parent=1 // loop_body
      %s45 = ssub.s32 %s40, 1
      %s46 = ssub.s32 %s40, 2
      %s47 = sadd.s32 %s40, 1
      %s48 = ssub.s32 %s40, %s47
      %p49 = scmp.eq.s32.totalorder %s48, 0
      %s51 = sadd.s32 %s50, 1
      %s52 = scalar_select %p49, %s50, %s51
      %p55 = pneg %p49
      %p56 = scmp.eq.s32.totalorder %s40, 1
      %p57 = por %p55, %p56
      %p58 = scmp.ne.s32.totalorder %s50, %s53
      %p59 = scmp.eq.s32.totalorder %s40, 0
      %p60 = por %p58, %p59
      %p61 = scmp.ne.s32.totalorder %s50, %s53
      %p62 = scmp.eq.s32.totalorder %s45, 1
      %p63 = por %p61, %p62
      %p64 = scmp.ne.s32.totalorder %s53, %s54
      %p65 = scmp.eq.s32.totalorder %s45, 0
      %p66 = por %p64, %p65
      %p67 = scmp.ne.s32.totalorder %s53, %s54
      %p68 = scmp.eq.s32.totalorder %s46, 1
      %p69 = por %p67, %p68
      %p71 = scmp.ne.s32.totalorder %s54, %s70
      %p72 = scmp.eq.s32.totalorder %s46, 0
      %p73 = por %p71, %p72
      %s74 = ssub.s32 %s40, %s47
      %p75 = scmp.eq.s32.totalorder %s74, 0
      %s77 = sadd.s32 %s76, 1
      %s78 = scalar_select %p75, %s76, %s77
      %p81 = pneg %p75
      %p82 = scmp.eq.s32.totalorder %s40, 1
      %p83 = por %p81, %p82
      %p84 = scmp.ne.s32.totalorder %s76, %s79
      %p85 = scmp.eq.s32.totalorder %s40, 0
      %p86 = por %p84, %p85
      %p87 = scmp.ne.s32.totalorder %s76, %s79
      %p88 = scmp.eq.s32.totalorder %s45, 1
      %p89 = por %p87, %p88
      %p90 = scmp.ne.s32.totalorder %s79, %s80
      %p91 = scmp.eq.s32.totalorder %s45, 0
      %p92 = por %p90, %p91
      %p93 = scmp.ne.s32.totalorder %s79, %s80
      %p94 = scmp.eq.s32.totalorder %s46, 1
      %p95 = por %p93, %p94
      %p97 = scmp.ne.s32.totalorder %s80, %s96
      %p98 = scmp.eq.s32.totalorder %s46, 0
      %p99 = por %p97, %p98
      %s100 = ssub.s32 %s40, %s47
      %p101 = scmp.eq.s32.totalorder %s100, 0
      %s103 = sadd.s32 %s102, 1
      %s104 = scalar_select %p101, %s102, %s103
      %p107 = pneg %p101
      %p108 = scmp.eq.s32.totalorder %s40, 1
      %p109 = por %p107, %p108
      %p110 = scmp.ne.s32.totalorder %s102, %s105
      %p111 = scmp.eq.s32.totalorder %s40, 0
      %p112 = por %p110, %p111
      %p113 = scmp.ne.s32.totalorder %s102, %s105
      %p114 = scmp.eq.s32.totalorder %s45, 1
      %p115 = por %p113, %p114
      %p116 = scmp.ne.s32.totalorder %s105, %s106
      %p117 = scmp.eq.s32.totalorder %s45, 0
      %p118 = por %p116, %p117
      %p119 = scmp.ne.s32.totalorder %s105, %s106
      %p120 = scmp.eq.s32.totalorder %s46, 1
      %p121 = por %p119, %p120
      %p123 = scmp.ne.s32.totalorder %s106, %s122
      %p124 = scmp.eq.s32.totalorder %s46, 0
      %p125 = por %p123, %p124
      %s126 = ssub.s32 %s40, %s47
      %p127 = scmp.eq.s32.totalorder %s126, 0
      %s129 = sadd.s32 %s128, 1
      %s130 = scalar_select %p127, %s128, %s129
      %p133 = pneg %p127
      %p134 = scmp.eq.s32.totalorder %s40, 1
      %p135 = por %p133, %p134
      %p136 = scmp.ne.s32.totalorder %s128, %s131
      %p137 = scmp.eq.s32.totalorder %s40, 0
      %p138 = por %p136, %p137
      %p139 = scmp.ne.s32.totalorder %s128, %s131
      %p140 = scmp.eq.s32.totalorder %s45, 1
      %p141 = por %p139, %p140
      %p142 = scmp.ne.s32.totalorder %s131, %s132
      %p143 = scmp.eq.s32.totalorder %s45, 0
      %p144 = por %p142, %p143
      %p145 = scmp.ne.s32.totalorder %s131, %s132
      %p146 = scmp.eq.s32.totalorder %s46, 1
      %p147 = por %p145, %p146
      %p149 = scmp.ne.s32.totalorder %s132, %s148
      %p150 = scmp.eq.s32.totalorder %s46, 0
      %p151 = por %p149, %p150
      %s152 = ssub.s32 %s40, %s47
      %p153 = scmp.eq.s32.totalorder %s152, 0
      %s155 = sadd.s32 %s154, 1
      %s156 = scalar_select %p153, %s154, %s155
      %p159 = pneg %p153
      %p160 = scmp.eq.s32.totalorder %s40, 1
      %p161 = por %p159, %p160
      %p162 = scmp.ne.s32.totalorder %s154, %s157
      %p163 = scmp.eq.s32.totalorder %s40, 0
      %p164 = por %p162, %p163
      %p165 = scmp.ne.s32.totalorder %s154, %s157
      %p166 = scmp.eq.s32.totalorder %s45, 1
      %p167 = por %p165, %p166
      %p168 = scmp.ne.s32.totalorder %s157, %s158
      %p169 = scmp.eq.s32.totalorder %s45, 0
      %p170 = por %p168, %p169
      %p171 = scmp.ne.s32.totalorder %s157, %s158
      %p172 = scmp.eq.s32.totalorder %s46, 1
      %p173 = por %p171, %p172
      %p175 = scmp.ne.s32.totalorder %s158, %s174
      %p176 = scmp.eq.s32.totalorder %s46, 0
      %p177 = por %p175, %p176
      %s179 = sadd.s32 %s178, 1
      %p182 = scmp.eq.s32.totalorder %s40, 1
      %p183 = scmp.ne.s32.totalorder %s178, %s180
      %p184 = scmp.eq.s32.totalorder %s40, 0
      %p185 = por %p183, %p184
      %p186 = scmp.ne.s32.totalorder %s178, %s180
      %p187 = scmp.eq.s32.totalorder %s45, 1
      %p188 = por %p186, %p187
      %p189 = scmp.ne.s32.totalorder %s180, %s181
      %p190 = scmp.eq.s32.totalorder %s45, 0
      %p191 = por %p189, %p190
      %p192 = scmp.ne.s32.totalorder %s180, %s181
      %p193 = scmp.eq.s32.totalorder %s46, 1
      %p194 = por %p192, %p193
      %p196 = scmp.ne.s32.totalorder %s181, %s195
      %p197 = scmp.eq.s32.totalorder %s46, 0
      %p198 = por %p196, %p197
      %s200 = sadd.s32 %s199, 1
      %p203 = scmp.eq.s32.totalorder %s40, 1
      %p204 = scmp.ne.s32.totalorder %s199, %s201
      %p205 = scmp.eq.s32.totalorder %s40, 0
      %p206 = por %p204, %p205
      %p207 = scmp.ne.s32.totalorder %s199, %s201
      %p208 = scmp.eq.s32.totalorder %s45, 1
      %p209 = por %p207, %p208
      %p210 = scmp.ne.s32.totalorder %s201, %s202
      %p211 = scmp.eq.s32.totalorder %s45, 0
      %p212 = por %p210, %p211
      %p213 = scmp.ne.s32.totalorder %s201, %s202
      %p214 = scmp.eq.s32.totalorder %s46, 1
      %p215 = por %p213, %p214
      %p217 = scmp.ne.s32.totalorder %s202, %s216
      %p218 = scmp.eq.s32.totalorder %s46, 0
      %p219 = por %p217, %p218
      %s221 = sadd.s32 %s220, 1
      %p224 = scmp.eq.s32.totalorder %s40, 1
      %p225 = scmp.ne.s32.totalorder %s220, %s222
      %p226 = scmp.eq.s32.totalorder %s40, 0
      %p227 = por %p225, %p226
      %p228 = scmp.ne.s32.totalorder %s220, %s222
      %p229 = scmp.eq.s32.totalorder %s45, 1
      %p230 = por %p228, %p229
      %p231 = scmp.ne.s32.totalorder %s222, %s223
      %p232 = scmp.eq.s32.totalorder %s45, 0
      %p233 = por %p231, %p232
      %p234 = scmp.ne.s32.totalorder %s222, %s223
      %p235 = scmp.eq.s32.totalorder %s46, 1
      %p236 = por %p234, %p235
      %p238 = scmp.ne.s32.totalorder %s223, %s237
      %p239 = scmp.eq.s32.totalorder %s46, 0
      %p240 = por %p238, %p239
      %s241 = ssub.s32 %s40, %s47
      %p242 = scmp.eq.s32.totalorder %s241, 0
      %s244 = sadd.s32 %s243, 1
      %s245 = scalar_select %p242, %s243, %s244
      %p248 = pneg %p242
      %p249 = scmp.eq.s32.totalorder %s40, 1
      %p250 = por %p248, %p249
      %p251 = scmp.ne.s32.totalorder %s243, %s246
      %p252 = scmp.eq.s32.totalorder %s40, 0
      %p253 = por %p251, %p252
      %p254 = scmp.ne.s32.totalorder %s243, %s246
      %p255 = scmp.eq.s32.totalorder %s45, 1
      %p256 = por %p254, %p255
      %p257 = scmp.ne.s32.totalorder %s246, %s247
      %p258 = scmp.eq.s32.totalorder %s45, 0
      %p259 = por %p257, %p258
      %p260 = scmp.ne.s32.totalorder %s246, %s247
      %p261 = scmp.eq.s32.totalorder %s46, 1
      %p262 = por %p260, %p261
      %p264 = scmp.ne.s32.totalorder %s247, %s263
      %p265 = scmp.eq.s32.totalorder %s46, 0
      %p266 = por %p264, %p265
      %s267 = ssub.s32 %s40, %s47
      %p268 = scmp.eq.s32.totalorder %s267, 0
      %s270 = sadd.s32 %s269, 1
      %s271 = scalar_select %p268, %s269, %s270
      %p274 = pneg %p268
      %p275 = scmp.eq.s32.totalorder %s40, 1
      %p276 = por %p274, %p275
      %p277 = scmp.ne.s32.totalorder %s269, %s272
      %p278 = scmp.eq.s32.totalorder %s40, 0
      %p279 = por %p277, %p278
      %p280 = scmp.ne.s32.totalorder %s269, %s272
      %p281 = scmp.eq.s32.totalorder %s45, 1
      %p282 = por %p280, %p281
      %p283 = scmp.ne.s32.totalorder %s272, %s273
      %p284 = scmp.eq.s32.totalorder %s45, 0
      %p285 = por %p283, %p284
      %p286 = scmp.ne.s32.totalorder %s272, %s273
      %p287 = scmp.eq.s32.totalorder %s46, 1
      %p288 = por %p286, %p287
      %p290 = scmp.ne.s32.totalorder %s273, %s289
      %p291 = scmp.eq.s32.totalorder %s46, 0
      %p292 = por %p290, %p291
      %p293 = scmp.le.s32.totalorder 1, %s40
      %p294 = scmp.lt.s32.totalorder %s40, 3
      %p295 = pnand %p293, %p294
      %p296 = pneg %p295
      // Predicated region
      $region9: #{decoder_forward.1} parent=5 // pred_check
        _
      $region10: #{decoder_forward.1} parent=5 // pred_check_branch
        %298 = sbr.rel (%p295) target = $region12
      $region11: #{decoder_forward.1} parent=5 // pred_region
        %s299 = ssub.s32 %s40, 1
        // Predicated region
        $region13: #{decoder_forward.1} parent=11 // pred_check
          %p300 = pneg %p191
        $region14: #{decoder_forward.1} parent=11 // pred_check_branch
          %302 = sbr.rel (%p300) target = $region16
        $region15: #{decoder_forward.1} parent=11 // pred_region
          %304 = vsyncadd [#allocation16], 0
          %s305 = sshll.u32 %s7, 4
          %s306 = int_to_ptr.hbm [resolvable:$true] %s305
          %s307 = sshll.u32 [#allocation15], 4
          %s308 = int_to_ptr.vmem [resolvable:$true] %s307
          %313 = dma.hbm_to_vmem [thread:$0]  %s306, 2048, %s308, [#allocation16], 128, 128, 8
        $region16: #{decoder_forward.1} parent=11 // pred_fallthru
          _
        // Predicated region
        $region17: #{decoder_forward.1} parent=11 // pred_check
          %p314 = pneg %p212
        $region18: #{decoder_forward.1} parent=11 // pred_check_branch
          %316 = sbr.rel (%p314) target = $region20
        $region19: #{decoder_forward.1} parent=11 // pred_region
          %318 = vsyncadd [#allocation16], 0
          %s320 = sshll.u32 %s8, 4
          %s321 = int_to_ptr.hbm [resolvable:$true] %s320
          %s322 = sshll.u32 [#allocation17], 4
          %s323 = int_to_ptr.vmem [resolvable:$true] %s322
          %325 = dma.hbm_to_vmem [thread:$0]  %s321, 32, %s323, [#allocation16]
        $region20: #{decoder_forward.1} parent=11 // pred_fallthru
          _
      $region12: #{decoder_forward.1} parent=5 // pred_fallthru
        _
      %p326 = scmp.lt.s32.totalorder %s40, 2
      // Predicated region
      $region21: #{decoder_forward.1} parent=5 // pred_check
        %p327 = pneg %p326
      $region22: #{decoder_forward.1} parent=5 // pred_check_branch
        %329 = sbr.rel (%p327) target = $region24
      $region23: #{decoder_forward.1} parent=5 // pred_region
        // Predicated region
        $region25: #{decoder_forward.1} parent=23 // pred_check
          %p330 = pneg %p60
        $region26: #{decoder_forward.1} parent=23 // pred_check_branch
          %332 = sbr.rel (%p330) target = $region28
        $region27: #{decoder_forward.1} parent=23 // pred_region
          %s333 = sand.u32 %s50, 1
          %s334 = scalar_lea.sflag [#allocation7], %s333
          %s335 = sand.u32 %s50, 1
          %s336 = smul.addr %s335, 8
          %s337 = scalar_lea.vmem [#allocation6], %s336
          %339 = vsyncadd %s334, 0
          %s340 = smul.addr %s40, 8
          %s341 = scalar_lea.hbm %s2, %s340
          %s343 = sshll.u32 %s341, 4
          %s344 = int_to_ptr.hbm [resolvable:$true] %s343
          %s345 = sshll.u32 %s337, 4
          %s346 = int_to_ptr.vmem [resolvable:$true] %s345
          %348 = dma.hbm_to_vmem [thread:$0]  %s344, 128, %s346, %s334
        $region28: #{decoder_forward.1} parent=23 // pred_fallthru
          _
        // Predicated region
        $region29: #{decoder_forward.1} parent=23 // pred_check
          %p349 = pneg %p86
        $region30: #{decoder_forward.1} parent=23 // pred_check_branch
          %351 = sbr.rel (%p349) target = $region32
        $region31: #{decoder_forward.1} parent=23 // pred_region
          %s352 = sand.u32 %s40, 1
          %s353 = scalar_lea.sflag [#allocation10], %s352
          %s354 = sand.u32 %s76, 1
          %s355 = smul.addr %s354, 8
          %s356 = scalar_lea.vmem [#allocation9], %s355
          %358 = vsyncadd %s353, 0
          %s359 = smul.addr %s40, 8
          %s360 = scalar_lea.hbm %s3, %s359
          %s362 = sshll.u32 %s360, 4
          %s363 = int_to_ptr.hbm [resolvable:$true] %s362
          %s364 = sshll.u32 %s356, 4
          %s365 = int_to_ptr.vmem [resolvable:$true] %s364
          %367 = dma.hbm_to_vmem [thread:$0]  %s363, 128, %s365, %s353
        $region32: #{decoder_forward.1} parent=23 // pred_fallthru
          _
        // Predicated region
        $region33: #{decoder_forward.1} parent=23 // pred_check
          %p368 = pneg %p112
        $region34: #{decoder_forward.1} parent=23 // pred_check_branch
          %370 = sbr.rel (%p368) target = $region36
        $region35: #{decoder_forward.1} parent=23 // pred_region
          %s371 = sand.u32 %s40, 1
          %s372 = scalar_lea.sflag [#allocation10], %s371
          %s373 = sand.u32 %s102, 1
          %s374 = smul.addr %s373, 256
          %s375 = scalar_lea.vmem [#allocation11], %s374
          %377 = vsyncadd %s372, 0
          %s378 = smul.addr %s40, 64
          %s379 = smul.addr %s378, 4
          %s380 = scalar_lea.hbm %s4, %s379
          %s381 = sshll.u32 %s380, 4
          %s382 = int_to_ptr.hbm [resolvable:$true] %s381
          %s383 = sshll.u32 %s375, 4
          %s384 = int_to_ptr.vmem [resolvable:$true] %s383
          %389 = dma.hbm_to_vmem [thread:$0]  %s382, 4096, %s384, %s372, 256, 256, 16
        $region36: #{decoder_forward.1} parent=23 // pred_fallthru
          _
        // Predicated region
        $region37: #{decoder_forward.1} parent=23 // pred_check
          %p390 = pneg %p138
        $region38: #{decoder_forward.1} parent=23 // pred_check_branch
          %392 = sbr.rel (%p390) target = $region40
        $region39: #{decoder_forward.1} parent=23 // pred_region
          %s393 = sand.u32 %s40, 1
          %s394 = scalar_lea.sflag [#allocation13], %s393
          %s395 = sand.u32 %s128, 1
          %s396 = smul.addr %s395, 256
          %s397 = scalar_lea.vmem [#allocation12], %s396
          %399 = vsyncadd %s394, 0
          %s400 = smul.addr %s40, 64
          %s401 = smul.addr %s400, 4
          %s402 = scalar_lea.hbm %s5, %s401
          %s403 = sshll.u32 %s402, 4
          %s404 = int_to_ptr.hbm [resolvable:$true] %s403
          %s405 = sshll.u32 %s397, 4
          %s406 = int_to_ptr.vmem [resolvable:$true] %s405
          %411 = dma.hbm_to_vmem [thread:$0]  %s404, 4096, %s406, %s394, 256, 256, 16
        $region40: #{decoder_forward.1} parent=23 // pred_fallthru
          _
        // Predicated region
        $region41: #{decoder_forward.1} parent=23 // pred_check
          %p412 = pneg %p164
        $region42: #{decoder_forward.1} parent=23 // pred_check_branch
          %414 = sbr.rel (%p412) target = $region44
        $region43: #{decoder_forward.1} parent=23 // pred_region
          %s415 = sand.u32 %s40, 1
          %s416 = scalar_lea.sflag [#allocation13], %s415
          %s417 = sand.u32 %s154, 1
          %s418 = smul.addr %s417, 4
          %s419 = scalar_lea.vmem [#allocation14], %s418
          %421 = vsyncadd %s416, 0
          %s422 = smul.addr %s40, 4
          %s423 = scalar_lea.hbm %s6, %s422
          %s425 = sshll.u32 %s423, 4
          %s426 = int_to_ptr.hbm [resolvable:$true] %s425
          %s427 = sshll.u32 %s419, 4
          %s428 = int_to_ptr.vmem [resolvable:$true] %s427
          %430 = dma.hbm_to_vmem [thread:$0]  %s426, 64, %s428, %s416
        $region44: #{decoder_forward.1} parent=23 // pred_fallthru
          _
      $region24: #{decoder_forward.1} parent=5 // pred_fallthru
        _
      %p431 = scmp.le.s32.totalorder 1, %s40
      %p432 = scmp.lt.s32.totalorder %s40, 3
      %p433 = pnand %p431, %p432
      %p434 = pneg %p433
      // Predicated region
      $region45: #{decoder_forward.1} parent=5 // pred_check
        _
      $region46: #{decoder_forward.1} parent=5 // pred_check_branch
        %436 = sbr.rel (%p433) target = $region48
      $region47: #{decoder_forward.1} parent=5 // pred_region
        %s437 = ssub.s32 %s40, 1
        %s438 = sand.u32 %s53, 1
        %s439 = scalar_lea.sflag [#allocation7], %s438
        %s440 = sand.u32 %s53, 1
        %s441 = smul.addr %s440, 8
        %s442 = scalar_lea.vmem [#allocation6], %s441
        // Predicated region
        $region49: #{decoder_forward.1} parent=47 // pred_check
          %p443 = pneg %p66
        $region50: #{decoder_forward.1} parent=47 // pred_check_branch
          %445 = sbr.rel (%p443) target = $region52
        $region51: #{decoder_forward.1} parent=47 // pred_region
          %447 = dma.done %s439, 128
        $region52: #{decoder_forward.1} parent=47 // pred_fallthru
          _
        %s448 = sand.u32 %s45, 1
        %s449 = scalar_lea.sflag [#allocation10], %s448
        %s450 = sand.u32 %s79, 1
        %s451 = smul.addr %s450, 8
        %s452 = scalar_lea.vmem [#allocation9], %s451
        // Predicated region
        $region53: #{decoder_forward.1} parent=47 // pred_check
          %p453 = pneg %p92
        $region54: #{decoder_forward.1} parent=47 // pred_check_branch
          %455 = sbr.rel (%p453) target = $region56
        $region55: #{decoder_forward.1} parent=47 // pred_region
          %457 = dma.done %s449, 128
        $region56: #{decoder_forward.1} parent=47 // pred_fallthru
          _
        %s458 = sand.u32 %s45, 1
        %s459 = scalar_lea.sflag [#allocation10], %s458
        %s460 = sand.u32 %s105, 1
        %s461 = smul.addr %s460, 256
        %s462 = scalar_lea.vmem [#allocation11], %s461
        // Predicated region
        $region57: #{decoder_forward.1} parent=47 // pred_check
          %p463 = pneg %p118
        $region58: #{decoder_forward.1} parent=47 // pred_check_branch
          %465 = sbr.rel (%p463) target = $region60
        $region59: #{decoder_forward.1} parent=47 // pred_region
          %467 = dma.done %s459, 4096
        $region60: #{decoder_forward.1} parent=47 // pred_fallthru
          _
        %s468 = sand.u32 %s45, 1
        %s469 = scalar_lea.sflag [#allocation13], %s468
        %s470 = sand.u32 %s131, 1
        %s471 = smul.addr %s470, 256
        %s472 = scalar_lea.vmem [#allocation12], %s471
        // Predicated region
        $region61: #{decoder_forward.1} parent=47 // pred_check
          %p473 = pneg %p144
        $region62: #{decoder_forward.1} parent=47 // pred_check_branch
          %475 = sbr.rel (%p473) target = $region64
        $region63: #{decoder_forward.1} parent=47 // pred_region
          %477 = dma.done %s469, 4096
        $region64: #{decoder_forward.1} parent=47 // pred_fallthru
          _
        %s478 = sand.u32 %s45, 1
        %s479 = scalar_lea.sflag [#allocation13], %s478
        %s480 = sand.u32 %s157, 1
        %s481 = smul.addr %s480, 4
        %s482 = scalar_lea.vmem [#allocation14], %s481
        // Predicated region
        $region65: #{decoder_forward.1} parent=47 // pred_check
          %p483 = pneg %p170
        $region66: #{decoder_forward.1} parent=47 // pred_check_branch
          %485 = sbr.rel (%p483) target = $region68
        $region67: #{decoder_forward.1} parent=47 // pred_region
          %487 = dma.done %s479, 64
        $region68: #{decoder_forward.1} parent=47 // pred_fallthru
          _
        // Predicated region
        $region69: #{decoder_forward.1} parent=47 // pred_check
          %p488 = pneg %p191
        $region70: #{decoder_forward.1} parent=47 // pred_check_branch
          %490 = sbr.rel (%p488) target = $region72
        $region71: #{decoder_forward.1} parent=47 // pred_region
          %492 = dma.done [#allocation16], 2048
        $region72: #{decoder_forward.1} parent=47 // pred_fallthru
          _
        // Predicated region
        $region73: #{decoder_forward.1} parent=47 // pred_check
          %p493 = pneg %p212
        $region74: #{decoder_forward.1} parent=47 // pred_check_branch
          %495 = sbr.rel (%p493) target = $region76
        $region75: #{decoder_forward.1} parent=47 // pred_region
          %497 = dma.done [#allocation16], 32
        $region76: #{decoder_forward.1} parent=47 // pred_fallthru
          _
        %s498 = sand.u32 %s53, 1
        %s499 = scalar_lea.sflag [#allocation7], %s498
        %s500 = sand.u32 %s53, 1
        %s501 = smul.addr %s500, 8
        %s502 = scalar_lea.vmem [#allocation6], %s501
        %p503 = pneg %p66
        %p504 = pneg %p63
        %s505 = sand.u32 %s45, 1
        %s506 = scalar_lea.sflag [#allocation10], %s505
        %s507 = sand.u32 %s79, 1
        %s508 = smul.addr %s507, 8
        %s509 = scalar_lea.vmem [#allocation9], %s508
        %p510 = pneg %p92
        %p511 = pneg %p89
        %s512 = sand.u32 %s45, 1
        %s513 = scalar_lea.sflag [#allocation10], %s512
        %s514 = sand.u32 %s105, 1
        %s515 = smul.addr %s514, 256
        %s516 = scalar_lea.vmem [#allocation11], %s515
        %p517 = pneg %p118
        %p518 = pneg %p115
        %s519 = sand.u32 %s45, 1
        %s520 = scalar_lea.sflag [#allocation13], %s519
        %s521 = sand.u32 %s131, 1
        %s522 = smul.addr %s521, 256
        %s523 = scalar_lea.vmem [#allocation12], %s522
        %p524 = pneg %p144
        %p525 = pneg %p141
        %s526 = sand.u32 %s45, 1
        %s527 = scalar_lea.sflag [#allocation13], %s526
        %s528 = sand.u32 %s157, 1
        %s529 = smul.addr %s528, 4
        %s530 = scalar_lea.vmem [#allocation14], %s529
        %p531 = pneg %p170
        %p532 = pneg %p167
        %p533 = pneg %p191
        %p534 = pneg %p188
        %p535 = pneg %p212
        %p536 = pneg %p209
        %p537 = pneg %p233
        %p538 = pneg %p230
        %p539 = pneg %p259
        %p540 = pneg %p256
        %s541 = sand.u32 %s45, 1
        %s542 = scalar_lea.sflag [#allocation20], %s541
        %s543 = sand.u32 %s246, 1
        %s544 = smul.addr %s543, 8
        %s545 = scalar_lea.vmem [#allocation19], %s544
        %p546 = pneg %p285
        %p547 = pneg %p282
        %s548 = sand.u32 %s45, 1
        %s549 = scalar_lea.sflag [#allocation20], %s548
        %s550 = sand.u32 %s272, 1
        %s551 = smul.addr %s550, 8
        %s552 = scalar_lea.vmem [#allocation21], %s551
        %p553 = scmp.eq.s32.totalorder %s45, 0
        // Predicated region
        $region77: #{decoder_forward.1} parent=47 // pred_check
          %p554 = pneg %p553
        $region78: #{decoder_forward.1} parent=47 // pred_check_branch
          %556 = sbr.rel (%p554) target = $region80
        $region79: #{decoder_forward.1} parent=47 // pred_region
          %s557 = sld [smem:[#allocation5]]
          %p558 = scmp.gt.s32.totalorder %s557, 0
          %s559 = scalar_select %p558, %s557, 0
          %p560 = scmp.lt.s32.totalorder %s559, 255
          %s561 = scalar_select %p560, %s559, 255
          %s562 = sld [smem:[#allocation5 + $0x1]]
          %p563 = scmp.gt.s32.totalorder %s562, 0
          %s564 = scalar_select %p563, %s562, 0
          %p565 = scmp.lt.s32.totalorder %s564, 255
          %s566 = scalar_select %p565, %s564, 255
          %s567 = sld [smem:[#allocation5 + $0x2]]
          %p568 = scmp.gt.s32.totalorder %s567, 0
          %s569 = scalar_select %p568, %s567, 0
          %p570 = scmp.lt.s32.totalorder %s569, 255
          %s571 = scalar_select %p570, %s569, 255
          %s572 = sld [smem:[#allocation5 + $0x3]]
          %p573 = scmp.gt.s32.totalorder %s572, 0
          %s574 = scalar_select %p573, %s572, 0
          %p575 = scmp.lt.s32.totalorder %s574, 255
          %s576 = scalar_select %p575, %s574, 255
          %s577 = sld [smem:[#allocation5 + $0x4]]
          %p578 = scmp.gt.s32.totalorder %s577, 0
          %s579 = scalar_select %p578, %s577, 0
          %p580 = scmp.lt.s32.totalorder %s579, 255
          %s581 = scalar_select %p580, %s579, 255
          %s582 = sld [smem:[#allocation5 + $0x5]]
          %p583 = scmp.gt.s32.totalorder %s582, 0
          %s584 = scalar_select %p583, %s582, 0
          %p585 = scmp.lt.s32.totalorder %s584, 255
          %s586 = scalar_select %p585, %s584, 255
          %s587 = sld [smem:[#allocation5 + $0x6]]
          %p588 = scmp.gt.s32.totalorder %s587, 0
          %s589 = scalar_select %p588, %s587, 0
          %p590 = scmp.lt.s32.totalorder %s589, 255
          %s591 = scalar_select %p590, %s589, 255
          %s592 = sld [smem:[#allocation5 + $0x7]]
          %p593 = scmp.gt.s32.totalorder %s592, 0
          %s594 = scalar_select %p593, %s592, 0
          %p595 = scmp.lt.s32.totalorder %s594, 255
          %s596 = scalar_select %p595, %s594, 255
          %s597 = scalar_lea.hbm %s1, %s561
          // Predicated region
          $region81: #{decoder_forward.1} parent=79 // pred_check
            _
          $region82: #{decoder_forward.1} parent=79 // pred_check_branch
            %599 = sbr.rel target = $region84
          $region83: #{decoder_forward.1} parent=79 // pred_region
            %600 = sst [smem:[#allocation24]] [#allocation23]
            %601 = sst [smem:[#allocation25]] [#allocation22]
          $region84: #{decoder_forward.1} parent=79 // pred_fallthru
            _
          %603 = shalt.err (0)
          %s605 = sshll.u32 %s597, 4
          %s606 = int_to_ptr.hbm [resolvable:$true] %s605
          %s607 = sshll.u32 [#allocation2], 4
          %s608 = int_to_ptr.vmem [resolvable:$true] %s607
          %610 = dma.hbm_to_vmem [thread:$0]  %s606, 16, %s608, [#allocation3]
          %s611 = scalar_lea.hbm %s1, %s566
          %s612 = scalar_lea.vmem [#allocation2], 1
          %s613 = scalar_lea.sflag [#allocation3], 1
          // Predicated region
          $region85: #{decoder_forward.1} parent=79 // pred_check
            _
          $region86: #{decoder_forward.1} parent=79 // pred_check_branch
            %615 = sbr.rel target = $region88
          $region87: #{decoder_forward.1} parent=79 // pred_region
            %616 = sst [smem:[#allocation24]] [#allocation27]
            %617 = sst [smem:[#allocation25]] [#allocation26]
          $region88: #{decoder_forward.1} parent=79 // pred_fallthru
            _
          %619 = shalt.err (0)
          %s621 = sshll.u32 %s611, 4
          %s622 = int_to_ptr.hbm [resolvable:$true] %s621
          %s623 = sshll.u32 %s612, 4
          %s624 = int_to_ptr.vmem [resolvable:$true] %s623
          %626 = dma.hbm_to_vmem [thread:$0]  %s622, 16, %s624, %s613
          %s627 = scalar_lea.hbm %s1, %s571
          %s628 = scalar_lea.vmem [#allocation2], 2
          %s629 = scalar_lea.sflag [#allocation3], 2
          // Predicated region
          $region89: #{decoder_forward.1} parent=79 // pred_check
            _
          $region90: #{decoder_forward.1} parent=79 // pred_check_branch
            %631 = sbr.rel target = $region92
          $region91: #{decoder_forward.1} parent=79 // pred_region
            %632 = sst [smem:[#allocation24]] [#allocation29]
            %633 = sst [smem:[#allocation25]] [#allocation28]
          $region92: #{decoder_forward.1} parent=79 // pred_fallthru
            _
          %635 = shalt.err (0)
          %s637 = sshll.u32 %s627, 4
          %s638 = int_to_ptr.hbm [resolvable:$true] %s637
          %s639 = sshll.u32 %s628, 4
          %s640 = int_to_ptr.vmem [resolvable:$true] %s639
          %642 = dma.hbm_to_vmem [thread:$0]  %s638, 16, %s640, %s629
          %s643 = scalar_lea.hbm %s1, %s576
          %s644 = scalar_lea.vmem [#allocation2], 3
          %s645 = scalar_lea.sflag [#allocation3], 3
          // Predicated region
          $region93: #{decoder_forward.1} parent=79 // pred_check
            _
          $region94: #{decoder_forward.1} parent=79 // pred_check_branch
            %647 = sbr.rel target = $region96
          $region95: #{decoder_forward.1} parent=79 // pred_region
            %648 = sst [smem:[#allocation24]] [#allocation31]
            %649 = sst [smem:[#allocation25]] [#allocation30]
          $region96: #{decoder_forward.1} parent=79 // pred_fallthru
            _
          %651 = shalt.err (0)
          %s653 = sshll.u32 %s643, 4
          %s654 = int_to_ptr.hbm [resolvable:$true] %s653
          %s655 = sshll.u32 %s644, 4
          %s656 = int_to_ptr.vmem [resolvable:$true] %s655
          %658 = dma.hbm_to_vmem [thread:$0]  %s654, 16, %s656, %s645
          %s659 = scalar_lea.hbm %s1, %s581
          %s660 = scalar_lea.vmem [#allocation2], 4
          %s661 = scalar_lea.sflag [#allocation3], 4
          // Predicated region
          $region97: #{decoder_forward.1} parent=79 // pred_check
            _
          $region98: #{decoder_forward.1} parent=79 // pred_check_branch
            %663 = sbr.rel target = $region100
          $region99: #{decoder_forward.1} parent=79 // pred_region
            %664 = sst [smem:[#allocation24]] [#allocation33]
            %665 = sst [smem:[#allocation25]] [#allocation32]
          $region100: #{decoder_forward.1} parent=79 // pred_fallthru
            _
          %667 = shalt.err (0)
          %s669 = sshll.u32 %s659, 4
          %s670 = int_to_ptr.hbm [resolvable:$true] %s669
          %s671 = sshll.u32 %s660, 4
          %s672 = int_to_ptr.vmem [resolvable:$true] %s671
          %674 = dma.hbm_to_vmem [thread:$0]  %s670, 16, %s672, %s661
          %s675 = scalar_lea.hbm %s1, %s586
          %s676 = scalar_lea.vmem [#allocation2], 5
          %s677 = scalar_lea.sflag [#allocation3], 5
          // Predicated region
          $region101: #{decoder_forward.1} parent=79 // pred_check
            _
          $region102: #{decoder_forward.1} parent=79 // pred_check_branch
            %679 = sbr.rel target = $region104
          $region103: #{decoder_forward.1} parent=79 // pred_region
            %680 = sst [smem:[#allocation24]] [#allocation35]
            %681 = sst [smem:[#allocation25]] [#allocation34]
          $region104: #{decoder_forward.1} parent=79 // pred_fallthru
            _
          %683 = shalt.err (0)
          %s685 = sshll.u32 %s675, 4
          %s686 = int_to_ptr.hbm [resolvable:$true] %s685
          %s687 = sshll.u32 %s676, 4
          %s688 = int_to_ptr.vmem [resolvable:$true] %s687
          %690 = dma.hbm_to_vmem [thread:$0]  %s686, 16, %s688, %s677
          %s691 = scalar_lea.hbm %s1, %s591
          %s692 = scalar_lea.vmem [#allocation2], 6
          %s693 = scalar_lea.sflag [#allocation3], 6
          // Predicated region
          $region105: #{decoder_forward.1} parent=79 // pred_check
            _
          $region106: #{decoder_forward.1} parent=79 // pred_check_branch
            %695 = sbr.rel target = $region108
          $region107: #{decoder_forward.1} parent=79 // pred_region
            %696 = sst [smem:[#allocation24]] [#allocation37]
            %697 = sst [smem:[#allocation25]] [#allocation36]
          $region108: #{decoder_forward.1} parent=79 // pred_fallthru
            _
          %699 = shalt.err (0)
          %s701 = sshll.u32 %s691, 4
          %s702 = int_to_ptr.hbm [resolvable:$true] %s701
          %s703 = sshll.u32 %s692, 4
          %s704 = int_to_ptr.vmem [resolvable:$true] %s703
          %706 = dma.hbm_to_vmem [thread:$0]  %s702, 16, %s704, %s693
          %s707 = scalar_lea.hbm %s1, %s596
          %s708 = scalar_lea.vmem [#allocation2], 7
          %s709 = scalar_lea.sflag [#allocation3], 7
          // Predicated region
          $region109: #{decoder_forward.1} parent=79 // pred_check
            _
          $region110: #{decoder_forward.1} parent=79 // pred_check_branch
            %711 = sbr.rel target = $region112
          $region111: #{decoder_forward.1} parent=79 // pred_region
            %712 = sst [smem:[#allocation24]] [#allocation39]
            %713 = sst [smem:[#allocation25]] [#allocation38]
          $region112: #{decoder_forward.1} parent=79 // pred_fallthru
            _
          %715 = shalt.err (0)
          %s717 = sshll.u32 %s707, 4
          %s718 = int_to_ptr.hbm [resolvable:$true] %s717
          %s719 = sshll.u32 %s708, 4
          %s720 = int_to_ptr.vmem [resolvable:$true] %s719
          %722 = dma.hbm_to_vmem [thread:$0]  %s718, 16, %s720, %s709
          %s723 = smul.u32 1, 1
          %s724 = sshll.u32 %s723, 4
          %725 = dma.done [#allocation3], %s724
          %s726 = sshll.u32 %s723, 4
          %727 = dma.done %s613, %s726
          %s728 = sshll.u32 %s723, 4
          %729 = dma.done %s629, %s728
          %s730 = sshll.u32 %s723, 4
          %731 = dma.done %s645, %s730
          %s732 = sshll.u32 %s723, 4
          %733 = dma.done %s661, %s732
          %s734 = sshll.u32 %s723, 4
          %735 = dma.done %s677, %s734
          %s736 = sshll.u32 %s723, 4
          %737 = dma.done %s693, %s736
          %s738 = sshll.u32 %s723, 4
          %739 = dma.done %s709, %s738
        $region80: #{decoder_forward.1} parent=47 // pred_fallthru
          _
        %v740 = vld [vmem:[#allocation2] sm:$0xff]
        %v741 = vpack.c.bf16 %v740, %v740
        %v742 = vld [vmem:[%s442] sm:$0xff]
        %v743 = vld [vmem:[%s452] sm:$0xff]
        %v744 = vld [vmem:[%s462] sm:$0xff]
        %v745 = vld [vmem:[%s462 + $0x8] sm:$0xff]
        %v746 = vld [vmem:[%s462 + $0x10] sm:$0xff]
        %v747 = vld [vmem:[%s462 + $0x18] sm:$0xff]
        %v748 = vld [vmem:[%s462 + $0x20] sm:$0xff]
        %v749 = vld [vmem:[%s462 + $0x28] sm:$0xff]
        %v750 = vld [vmem:[%s462 + $0x30] sm:$0xff]
        %v751 = vld [vmem:[%s462 + $0x38] sm:$0xff]
        %v752 = vld [vmem:[%s462 + $0x40] sm:$0xff]
        %v753 = vld [vmem:[%s462 + $0x48] sm:$0xff]
        %v754 = vld [vmem:[%s462 + $0x50] sm:$0xff]
        %v755 = vld [vmem:[%s462 + $0x58] sm:$0xff]
        %v756 = vld [vmem:[%s462 + $0x60] sm:$0xff]
        %v757 = vld [vmem:[%s462 + $0x68] sm:$0xff]
        %v758 = vld [vmem:[%s462 + $0x70] sm:$0xff]
        %v759 = vld [vmem:[%s462 + $0x78] sm:$0xff]
        %v760 = vld [vmem:[%s462 + $0x80] sm:$0xff]
        %v761 = vld [vmem:[%s462 + $0x88] sm:$0xff]
        %v762 = vld [vmem:[%s462 + $0x90] sm:$0xff]
        %v763 = vld [vmem:[%s462 + $0x98] sm:$0xff]
        %v764 = vld [vmem:[%s462 + $0xa0] sm:$0xff]
        %v765 = vld [vmem:[%s462 + $0xa8] sm:$0xff]
        %v766 = vld [vmem:[%s462 + $0xb0] sm:$0xff]
        %v767 = vld [vmem:[%s462 + $0xb8] sm:$0xff]
        %v768 = vld [vmem:[%s462 + $0xc0] sm:$0xff]
        %v769 = vld [vmem:[%s462 + $0xc8] sm:$0xff]
        %v770 = vld [vmem:[%s462 + $0xd0] sm:$0xff]
        %v771 = vld [vmem:[%s462 + $0xd8] sm:$0xff]
        %v772 = vld [vmem:[%s462 + $0xe0] sm:$0xff]
        %v773 = vld [vmem:[%s462 + $0xe8] sm:$0xff]
        %v774 = vld [vmem:[%s462 + $0xf0] sm:$0xff]
        %v775 = vld [vmem:[%s462 + $0xf8] sm:$0xff]
        %v776 = vpack.c.bf16 %v742, %v742
        %v777 = vld [vmem:[%s472] sm:$0xff]
        %v778 = vld [vmem:[%s472 + $0x8] sm:$0xff]
        %v779 = vld [vmem:[%s472 + $0x10] sm:$0xff]
        %v780 = vld [vmem:[%s472 + $0x18] sm:$0xff]
        %v781 = vld [vmem:[%s472 + $0x20] sm:$0xff]
        %v782 = vld [vmem:[%s472 + $0x28] sm:$0xff]
        %v783 = vld [vmem:[%s472 + $0x30] sm:$0xff]
        %v784 = vld [vmem:[%s472 + $0x38] sm:$0xff]
        %v785 = vld [vmem:[%s472 + $0x40] sm:$0xff]
        %v786 = vld [vmem:[%s472 + $0x48] sm:$0xff]
        %v787 = vld [vmem:[%s472 + $0x50] sm:$0xff]
        %v788 = vld [vmem:[%s472 + $0x58] sm:$0xff]
        %v789 = vld [vmem:[%s472 + $0x60] sm:$0xff]
        %v790 = vld [vmem:[%s472 + $0x68] sm:$0xff]
        %v791 = vld [vmem:[%s472 + $0x70] sm:$0xff]
        %v792 = vld [vmem:[%s472 + $0x78] sm:$0xff]
        %v793 = vld [vmem:[%s472 + $0x80] sm:$0xff]
        %v794 = vld [vmem:[%s472 + $0x88] sm:$0xff]
        %v795 = vld [vmem:[%s472 + $0x90] sm:$0xff]
        %v796 = vld [vmem:[%s472 + $0x98] sm:$0xff]
        %v797 = vld [vmem:[%s472 + $0xa0] sm:$0xff]
        %v798 = vld [vmem:[%s472 + $0xa8] sm:$0xff]
        %v799 = vld [vmem:[%s472 + $0xb0] sm:$0xff]
        %v800 = vld [vmem:[%s472 + $0xb8] sm:$0xff]
        %v801 = vld [vmem:[%s472 + $0xc0] sm:$0xff]
        %v802 = vld [vmem:[%s472 + $0xc8] sm:$0xff]
        %v803 = vld [vmem:[%s472 + $0xd0] sm:$0xff]
        %v804 = vld [vmem:[%s472 + $0xd8] sm:$0xff]
        %v805 = vld [vmem:[%s472 + $0xe0] sm:$0xff]
        %v806 = vld [vmem:[%s472 + $0xe8] sm:$0xff]
        %v807 = vld [vmem:[%s472 + $0xf0] sm:$0xff]
        %v808 = vld [vmem:[%s472 + $0xf8] sm:$0xff]
        %v841 = vunpack.c.l.b16 %v777
        %v842 = vunpack.c.h.b16 %v777
        %v843 = vunpack.c.l.b16 %v778
        %v844 = vunpack.c.h.b16 %v778
        %v845 = vunpack.c.l.b16 %v779
        %v846 = vunpack.c.h.b16 %v779
        %v847 = vunpack.c.l.b16 %v780
        %v848 = vunpack.c.h.b16 %v780
        %v849 = vunpack.c.l.b16 %v781
        %v850 = vunpack.c.h.b16 %v781
        %v851 = vunpack.c.l.b16 %v782
        %v852 = vunpack.c.h.b16 %v782
        %v853 = vunpack.c.l.b16 %v783
        %v854 = vunpack.c.h.b16 %v783
        %v855 = vunpack.c.l.b16 %v784
        %v856 = vunpack.c.h.b16 %v784
        %v857 = vunpack.c.l.b16 %v785
        %v858 = vunpack.c.h.b16 %v785
        %v859 = vunpack.c.l.b16 %v786
        %v860 = vunpack.c.h.b16 %v786
        %v861 = vunpack.c.l.b16 %v787
        %v862 = vunpack.c.h.b16 %v787
        %v863 = vunpack.c.l.b16 %v788
        %v864 = vunpack.c.h.b16 %v788
        %v865 = vunpack.c.l.b16 %v789
        %v866 = vunpack.c.h.b16 %v789
        %v867 = vunpack.c.l.b16 %v790
        %v868 = vunpack.c.h.b16 %v790
        %v869 = vunpack.c.l.b16 %v791
        %v870 = vunpack.c.h.b16 %v791
        %v871 = vunpack.c.l.b16 %v792
        %v872 = vunpack.c.h.b16 %v792
        %v873 = vunpack.c.l.b16 %v793
        %v874 = vunpack.c.h.b16 %v793
        %v875 = vunpack.c.l.b16 %v794
        %v876 = vunpack.c.h.b16 %v794
        %v877 = vunpack.c.l.b16 %v795
        %v878 = vunpack.c.h.b16 %v795
        %v879 = vunpack.c.l.b16 %v796
        %v880 = vunpack.c.h.b16 %v796
        %v881 = vunpack.c.l.b16 %v797
        %v882 = vunpack.c.h.b16 %v797
        %v883 = vunpack.c.l.b16 %v798
        %v884 = vunpack.c.h.b16 %v798
        %v885 = vunpack.c.l.b16 %v799
        %v886 = vunpack.c.h.b16 %v799
        %v887 = vunpack.c.l.b16 %v800
        %v888 = vunpack.c.h.b16 %v800
        %v889 = vunpack.c.l.b16 %v801
        %v890 = vunpack.c.h.b16 %v801
        %v891 = vunpack.c.l.b16 %v802
        %v892 = vunpack.c.h.b16 %v802
        %v893 = vunpack.c.l.b16 %v803
        %v894 = vunpack.c.h.b16 %v803
        %v895 = vunpack.c.l.b16 %v804
        %v896 = vunpack.c.h.b16 %v804
        %v897 = vunpack.c.l.b16 %v805
        %v898 = vunpack.c.h.b16 %v805
        %v899 = vunpack.c.l.b16 %v806
        %v900 = vunpack.c.h.b16 %v806
        %v901 = vunpack.c.l.b16 %v807
        %v902 = vunpack.c.h.b16 %v807
        %v903 = vunpack.c.l.b16 %v808
        %v904 = vunpack.c.h.b16 %v808
        %v905 = vpack.c.b16 %v845, %v841
        %v906 = vpack.c.b16 %v846, %v842
        %v907 = vpack.c.b16 %v847, %v843
        %v908 = vpack.c.b16 %v848, %v844
        %v909 = vpack.c.b16 %v853, %v849
        %v910 = vpack.c.b16 %v854, %v850
        %v911 = vpack.c.b16 %v855, %v851
        %v912 = vpack.c.b16 %v856, %v852
        %v913 = vpack.c.b16 %v861, %v857
        %v914 = vpack.c.b16 %v862, %v858
        %v915 = vpack.c.b16 %v863, %v859
        %v916 = vpack.c.b16 %v864, %v860
        %v917 = vpack.c.b16 %v869, %v865
        %v918 = vpack.c.b16 %v870, %v866
        %v919 = vpack.c.b16 %v871, %v867
        %v920 = vpack.c.b16 %v872, %v868
        %v921 = vpack.c.b16 %v877, %v873
        %v922 = vpack.c.b16 %v878, %v874
        %v923 = vpack.c.b16 %v879, %v875
        %v924 = vpack.c.b16 %v880, %v876
        %v925 = vpack.c.b16 %v885, %v881
        %v926 = vpack.c.b16 %v886, %v882
        %v927 = vpack.c.b16 %v887, %v883
        %v928 = vpack.c.b16 %v888, %v884
        %v929 = vpack.c.b16 %v893, %v889
        %v930 = vpack.c.b16 %v894, %v890
        %v931 = vpack.c.b16 %v895, %v891
        %v932 = vpack.c.b16 %v896, %v892
        %v933 = vpack.c.b16 %v901, %v897
        %v934 = vpack.c.b16 %v902, %v898
        %v935 = vpack.c.b16 %v903, %v899
        %v936 = vpack.c.b16 %v904, %v900
        %969 = vmatpush.bf16.msra.mxu0 %v933
        %970 = vmatpush.bf16.msra.mxu0 %v929
        %971 = vmatpush.bf16.msra.mxu0 %v925
        %972 = vmatpush.bf16.msra.mxu0 %v921
        %973 = vmatpush.bf16.msra.mxu0 %v917
        %974 = vmatpush.bf16.msra.mxu0 %v913
        %975 = vmatpush.bf16.msra.mxu0 %v909
        %976 = vmatpush.bf16.msra.mxu0 %v905
        %977 = vmatmul.bf16.gmra.mxu0 %v776
        %v978 = vpop.f32.mrf.mxu0
        %v979 = vadd.f32 0.0, %v978
        %v980 = vpop.f32.mrf.mxu0
        %981 = vdwg.mxu0
        %982 = vmatpush.bf16.msra.mxu0 %v934
        %983 = vmatpush.bf16.msra.mxu0 %v930
        %984 = vmatpush.bf16.msra.mxu0 %v926
        %985 = vmatpush.bf16.msra.mxu0 %v922
        %986 = vmatpush.bf16.msra.mxu0 %v918
        %987 = vmatpush.bf16.msra.mxu0 %v914
        %988 = vmatpush.bf16.msra.mxu0 %v910
        %989 = vmatpush.bf16.msra.mxu0 %v906
        %990 = vmatmul.bf16.gmra.mxu0 %v776
        %v991 = vpop.f32.mrf.mxu0
        %v992 = vadd.f32 0.0, %v991
        %v993 = vpop.f32.mrf.mxu0
        %994 = vdwg.mxu0
        %995 = vmatpush.bf16.msra.mxu0 %v935
        %996 = vmatpush.bf16.msra.mxu0 %v931
        %997 = vmatpush.bf16.msra.mxu0 %v927
        %998 = vmatpush.bf16.msra.mxu0 %v923
        %999 = vmatpush.bf16.msra.mxu0 %v919
        %1000 = vmatpush.bf16.msra.mxu0 %v915
        %1001 = vmatpush.bf16.msra.mxu0 %v911
        %1002 = vmatpush.bf16.msra.mxu0 %v907
        %1003 = vmatmul.bf16.gmra.mxu0 %v776
        %v1004 = vpop.f32.mrf.mxu0
        %v1005 = vadd.f32 0.0, %v1004
        %v1006 = vpop.f32.mrf.mxu0
        %1007 = vdwg.mxu0
        %1008 = vmatpush.bf16.msra.mxu0 %v936
        %1009 = vmatpush.bf16.msra.mxu0 %v932
        %1010 = vmatpush.bf16.msra.mxu0 %v928
        %1011 = vmatpush.bf16.msra.mxu0 %v924
        %1012 = vmatpush.bf16.msra.mxu0 %v920
        %1013 = vmatpush.bf16.msra.mxu0 %v916
        %1014 = vmatpush.bf16.msra.mxu0 %v912
        %1015 = vmatpush.bf16.msra.mxu0 %v908
        %1016 = vmatmul.bf16.gmra.mxu0 %v776
        %v1017 = vpop.f32.mrf.mxu0
        %v1018 = vadd.f32 0.0, %v1017
        %v1019 = vpop.f32.mrf.mxu0
        %1020 = vdwg.mxu0
        %v1053 = vunpack.c.l.b16 %v744
        %v1054 = vunpack.c.h.b16 %v744
        %v1055 = vunpack.c.l.b16 %v745
        %v1056 = vunpack.c.h.b16 %v745
        %v1057 = vunpack.c.l.b16 %v746
        %v1058 = vunpack.c.h.b16 %v746
        %v1059 = vunpack.c.l.b16 %v747
        %v1060 = vunpack.c.h.b16 %v747
        %v1061 = vunpack.c.l.b16 %v748
        %v1062 = vunpack.c.h.b16 %v748
        %v1063 = vunpack.c.l.b16 %v749
        %v1064 = vunpack.c.h.b16 %v749
        %v1065 = vunpack.c.l.b16 %v750
        %v1066 = vunpack.c.h.b16 %v750
        %v1067 = vunpack.c.l.b16 %v751
        %v1068 = vunpack.c.h.b16 %v751
        %v1069 = vunpack.c.l.b16 %v752
        %v1070 = vunpack.c.h.b16 %v752
        %v1071 = vunpack.c.l.b16 %v753
        %v1072 = vunpack.c.h.b16 %v753
        %v1073 = vunpack.c.l.b16 %v754
        %v1074 = vunpack.c.h.b16 %v754
        %v1075 = vunpack.c.l.b16 %v755
        %v1076 = vunpack.c.h.b16 %v755
        %v1077 = vunpack.c.l.b16 %v756
        %v1078 = vunpack.c.h.b16 %v756
        %v1079 = vunpack.c.l.b16 %v757
        %v1080 = vunpack.c.h.b16 %v757
        %v1081 = vunpack.c.l.b16 %v758
        %v1082 = vunpack.c.h.b16 %v758
        %v1083 = vunpack.c.l.b16 %v759
        %v1084 = vunpack.c.h.b16 %v759
        %v1085 = vunpack.c.l.b16 %v760
        %v1086 = vunpack.c.h.b16 %v760
        %v1087 = vunpack.c.l.b16 %v761
        %v1088 = vunpack.c.h.b16 %v761
        %v1089 = vunpack.c.l.b16 %v762
        %v1090 = vunpack.c.h.b16 %v762
        %v1091 = vunpack.c.l.b16 %v763
        %v1092 = vunpack.c.h.b16 %v763
        %v1093 = vunpack.c.l.b16 %v764
        %v1094 = vunpack.c.h.b16 %v764
        %v1095 = vunpack.c.l.b16 %v765
        %v1096 = vunpack.c.h.b16 %v765
        %v1097 = vunpack.c.l.b16 %v766
        %v1098 = vunpack.c.h.b16 %v766
        %v1099 = vunpack.c.l.b16 %v767
        %v1100 = vunpack.c.h.b16 %v767
        %v1101 = vunpack.c.l.b16 %v768
        %v1102 = vunpack.c.h.b16 %v768
        %v1103 = vunpack.c.l.b16 %v769
        %v1104 = vunpack.c.h.b16 %v769
        %v1105 = vunpack.c.l.b16 %v770
        %v1106 = vunpack.c.h.b16 %v770
        %v1107 = vunpack.c.l.b16 %v771
        %v1108 = vunpack.c.h.b16 %v771
        %v1109 = vunpack.c.l.b16 %v772
        %v1110 = vunpack.c.h.b16 %v772
        %v1111 = vunpack.c.l.b16 %v773
        %v1112 = vunpack.c.h.b16 %v773
        %v1113 = vunpack.c.l.b16 %v774
        %v1114 = vunpack.c.h.b16 %v774
        %v1115 = vunpack.c.l.b16 %v775
        %v1116 = vunpack.c.h.b16 %v775
        %v1117 = vpack.c.b16 %v1057, %v1053
        %v1118 = vpack.c.b16 %v1058, %v1054
        %v1119 = vpack.c.b16 %v1059, %v1055
        %v1120 = vpack.c.b16 %v1060, %v1056
        %v1121 = vpack.c.b16 %v1065, %v1061
        %v1122 = vpack.c.b16 %v1066, %v1062
        %v1123 = vpack.c.b16 %v1067, %v1063
        %v1124 = vpack.c.b16 %v1068, %v1064
        %v1125 = vpack.c.b16 %v1073, %v1069
        %v1126 = vpack.c.b16 %v1074, %v1070
        %v1127 = vpack.c.b16 %v1075, %v1071
        %v1128 = vpack.c.b16 %v1076, %v1072
        %v1129 = vpack.c.b16 %v1081, %v1077
        %v1130 = vpack.c.b16 %v1082, %v1078
        %v1131 = vpack.c.b16 %v1083, %v1079
        %v1132 = vpack.c.b16 %v1084, %v1080
        %v1133 = vpack.c.b16 %v1089, %v1085
        %v1134 = vpack.c.b16 %v1090, %v1086
        %v1135 = vpack.c.b16 %v1091, %v1087
        %v1136 = vpack.c.b16 %v1092, %v1088
        %v1137 = vpack.c.b16 %v1097, %v1093
        %v1138 = vpack.c.b16 %v1098, %v1094
        %v1139 = vpack.c.b16 %v1099, %v1095
        %v1140 = vpack.c.b16 %v1100, %v1096
        %v1141 = vpack.c.b16 %v1105, %v1101
        %v1142 = vpack.c.b16 %v1106, %v1102
        %v1143 = vpack.c.b16 %v1107, %v1103
        %v1144 = vpack.c.b16 %v1108, %v1104
        %v1145 = vpack.c.b16 %v1113, %v1109
        %v1146 = vpack.c.b16 %v1114, %v1110
        %v1147 = vpack.c.b16 %v1115, %v1111
        %v1148 = vpack.c.b16 %v1116, %v1112
        %1181 = vmatpush.bf16.msra.mxu0 %v1145
        %1182 = vmatpush.bf16.msra.mxu0 %v1141
        %1183 = vmatpush.bf16.msra.mxu0 %v1137
        %1184 = vmatpush.bf16.msra.mxu0 %v1133
        %1185 = vmatpush.bf16.msra.mxu0 %v1129
        %1186 = vmatpush.bf16.msra.mxu0 %v1125
        %1187 = vmatpush.bf16.msra.mxu0 %v1121
        %1188 = vmatpush.bf16.msra.mxu0 %v1117
        %1189 = vmatmul.bf16.gmra.mxu0 %v741
        %v1190 = vpop.f32.mrf.mxu0
        %v1191 = vadd.f32 %v979, %v1190
        %v1192 = vpop.f32.mrf.mxu0
        %1193 = vdwg.mxu0
        %1194 = vmatpush.bf16.msra.mxu0 %v1146
        %1195 = vmatpush.bf16.msra.mxu0 %v1142
        %1196 = vmatpush.bf16.msra.mxu0 %v1138
        %1197 = vmatpush.bf16.msra.mxu0 %v1134
        %1198 = vmatpush.bf16.msra.mxu0 %v1130
        %1199 = vmatpush.bf16.msra.mxu0 %v1126
        %1200 = vmatpush.bf16.msra.mxu0 %v1122
        %1201 = vmatpush.bf16.msra.mxu0 %v1118
        %1202 = vmatmul.bf16.gmra.mxu0 %v741
        %v1203 = vpop.f32.mrf.mxu0
        %v1204 = vadd.f32 %v992, %v1203
        %v1205 = vpop.f32.mrf.mxu0
        %1206 = vdwg.mxu0
        %1207 = vmatpush.bf16.msra.mxu0 %v1147
        %1208 = vmatpush.bf16.msra.mxu0 %v1143
        %1209 = vmatpush.bf16.msra.mxu0 %v1139
        %1210 = vmatpush.bf16.msra.mxu0 %v1135
        %1211 = vmatpush.bf16.msra.mxu0 %v1131
        %1212 = vmatpush.bf16.msra.mxu0 %v1127
        %1213 = vmatpush.bf16.msra.mxu0 %v1123
        %1214 = vmatpush.bf16.msra.mxu0 %v1119
        %1215 = vmatmul.bf16.gmra.mxu0 %v741
        %v1216 = vpop.f32.mrf.mxu0
        %v1217 = vadd.f32 %v1005, %v1216
        %v1218 = vpop.f32.mrf.mxu0
        %1219 = vdwg.mxu0
        %1220 = vmatpush.bf16.msra.mxu0 %v1148
        %1221 = vmatpush.bf16.msra.mxu0 %v1144
        %1222 = vmatpush.bf16.msra.mxu0 %v1140
        %1223 = vmatpush.bf16.msra.mxu0 %v1136
        %1224 = vmatpush.bf16.msra.mxu0 %v1132
        %1225 = vmatpush.bf16.msra.mxu0 %v1128
        %1226 = vmatpush.bf16.msra.mxu0 %v1124
        %1227 = vmatpush.bf16.msra.mxu0 %v1120
        %1228 = vmatmul.bf16.gmra.mxu0 %v741
        %v1229 = vpop.f32.mrf.mxu0
        %v1230 = vadd.f32 %v1018, %v1229
        %v1231 = vpop.f32.mrf.mxu0
        %1232 = vdwg.mxu0
        %v1233 = vld [vmem:[%s482] sm:$0xf]
        %v1235 = vperm.slane %v1233, 0
        %v1236 = vperm.slane %v1233, 1
        %v1237 = vperm.slane %v1233, 2
        %v1238 = vperm.slane %v1233, 3
        %v1243 = vadd.f32 %v1191, %v1235
        %v1244 = vadd.f32 %v1204, %v1236
        %v1245 = vadd.f32 %v1217, %v1237
        %v1246 = vadd.f32 %v1230, %v1238
        %v1247 = vxor.u32 %v1243, 2147483648
        %v1248 = vxor.u32 %v1244, 2147483648
        %v1249 = vxor.u32 %v1245, 2147483648
        %v1250 = vmul.f32 %v1247, 1.442695
        %v1251 = vpow.pop %v1250
        %v1252 = vmul.f32 %v1248, 1.442695
        %v1253 = vpow.pop %v1252
        %v1254 = vmul.f32 %v1249, 1.442695
        %v1255 = vpow.pop %v1254
        %v1256 = vadd.f32 %v1251, 1.0
        %v1257 = vadd.f32 %v1253, 1.0
        %v1258 = vadd.f32 %v1255, 1.0
        %v1259 = vrcp.pop %v1256
        %v1260 = vmul.f32 %v1256, %v1259
        %v1261 = vsub.f32 1.0, %v1260
        %v1262 = vmul.f32 %v1259, %v1261
        %v1263 = vadd.f32 %v1259, %v1262
        %vm1264 = vweird.f32 %v1256
        %vm1265 = vweird.f32 %v1259
        %vm1266 = vmor %vm1264, %vm1265
        %v1267 = vsel %vm1266, %v1259, %v1263
        %v1268 = vand.u32 2147483647, %v1256
        %vm1269 = vcmp.eq.f32.partialorder %v1268, 8.507059e+37
        %v1270 = vand.u32 %v1256, 2147483648
        %v1271 = vor.u32 1.1754944e-38, %v1270
        %v1272 = vsel %vm1269, %v1271, %v1267
        %v1273 = vmul.f32 1.0, %v1272
        %v1274 = vrcp.pop %v1257
        %v1275 = vmul.f32 %v1257, %v1274
        %v1276 = vsub.f32 1.0, %v1275
        %v1277 = vmul.f32 %v1274, %v1276
        %v1278 = vadd.f32 %v1274, %v1277
        %vm1279 = vweird.f32 %v1257
        %vm1280 = vweird.f32 %v1274
        %vm1281 = vmor %vm1279, %vm1280
        %v1282 = vsel %vm1281, %v1274, %v1278
        %v1283 = vand.u32 2147483647, %v1257
        %vm1284 = vcmp.eq.f32.partialorder %v1283, 8.507059e+37
        %v1285 = vand.u32 %v1257, 2147483648
        %v1286 = vor.u32 1.1754944e-38, %v1285
        %v1287 = vsel %vm1284, %v1286, %v1282
        %v1288 = vmul.f32 1.0, %v1287
        %v1289 = vrcp.pop %v1258
        %v1290 = vmul.f32 %v1258, %v1289
        %v1291 = vsub.f32 1.0, %v1290
        %v1292 = vmul.f32 %v1289, %v1291
        %v1293 = vadd.f32 %v1289, %v1292
        %vm1294 = vweird.f32 %v1258
        %vm1295 = vweird.f32 %v1289
        %vm1296 = vmor %vm1294, %vm1295
        %v1297 = vsel %vm1296, %v1289, %v1293
        %v1298 = vand.u32 2147483647, %v1258
        %vm1299 = vcmp.eq.f32.partialorder %v1298, 8.507059e+37
        %v1300 = vand.u32 %v1258, 2147483648
        %v1301 = vor.u32 1.1754944e-38, %v1300
        %v1302 = vsel %vm1299, %v1301, %v1297
        %v1303 = vmul.f32 1.0, %v1302
        %v1304 = vtanh.pop %v1246
        %v1305 = vmul.f32 %v1288, %v743
        %v1306 = vmul.f32 %v1273, %v1304
        %v1307 = vadd.f32 %v1305, %v1306
        %v1308 = vtanh.pop %v1307
        %v1309 = vmul.f32 %v1303, %v1308
        %1310 = vst [vmem:[%s545] sm:$0xff] %v1309
        %1311 = vst [vmem:[%s552] sm:$0xff] %v1307
        %1312 = vst [vmem:[#allocation2] sm:$0xff] %v1309
        %p1313 = scmp.eq.s32.totalorder %s45, 1
        // Predicated region
        $region113: #{decoder_forward.1} parent=47 // pred_check
          %p1314 = pneg %p1313
        $region114: #{decoder_forward.1} parent=47 // pred_check_branch
          %1316 = sbr.rel (%p1314) target = $region116
        $region115: #{decoder_forward.1} parent=47 // pred_region
          %v1317 = vpack.c.bf16 %v1309, %v1309
          %v1318 = vld [vmem:[#allocation15] sm:$0xff]
          %v1319 = vld [vmem:[#allocation15 + $0x8] sm:$0xff]
          %v1320 = vld [vmem:[#allocation15 + $0x10] sm:$0xff]
          %v1321 = vld [vmem:[#allocation15 + $0x18] sm:$0xff]
          %v1322 = vld [vmem:[#allocation15 + $0x20] sm:$0xff]
          %v1323 = vld [vmem:[#allocation15 + $0x28] sm:$0xff]
          %v1324 = vld [vmem:[#allocation15 + $0x30] sm:$0xff]
          %v1325 = vld [vmem:[#allocation15 + $0x38] sm:$0xff]
          %v1326 = vld [vmem:[#allocation15 + $0x40] sm:$0xff]
          %v1327 = vld [vmem:[#allocation15 + $0x48] sm:$0xff]
          %v1328 = vld [vmem:[#allocation15 + $0x50] sm:$0xff]
          %v1329 = vld [vmem:[#allocation15 + $0x58] sm:$0xff]
          %v1330 = vld [vmem:[#allocation15 + $0x60] sm:$0xff]
          %v1331 = vld [vmem:[#allocation15 + $0x68] sm:$0xff]
          %v1332 = vld [vmem:[#allocation15 + $0x70] sm:$0xff]
          %v1333 = vld [vmem:[#allocation15 + $0x78] sm:$0xff]
          %v1334 = vld [vmem:[#allocation17] sm:$0x3]
          %v1336 = vperm.slane %v1334, 0
          %v1337 = vperm.slane %v1334, 1
          %v1356 = vunpack.c.l.b16 %v1318
          %v1357 = vunpack.c.h.b16 %v1318
          %v1358 = vunpack.c.l.b16 %v1319
          %v1359 = vunpack.c.h.b16 %v1319
          %v1360 = vunpack.c.l.b16 %v1320
          %v1361 = vunpack.c.h.b16 %v1320
          %v1362 = vunpack.c.l.b16 %v1321
          %v1363 = vunpack.c.h.b16 %v1321
          %v1364 = vunpack.c.l.b16 %v1322
          %v1365 = vunpack.c.h.b16 %v1322
          %v1366 = vunpack.c.l.b16 %v1323
          %v1367 = vunpack.c.h.b16 %v1323
          %v1368 = vunpack.c.l.b16 %v1324
          %v1369 = vunpack.c.h.b16 %v1324
          %v1370 = vunpack.c.l.b16 %v1325
          %v1371 = vunpack.c.h.b16 %v1325
          %v1372 = vunpack.c.l.b16 %v1326
          %v1373 = vunpack.c.h.b16 %v1326
          %v1374 = vunpack.c.l.b16 %v1327
          %v1375 = vunpack.c.h.b16 %v1327
          %v1376 = vunpack.c.l.b16 %v1328
          %v1377 = vunpack.c.h.b16 %v1328
          %v1378 = vunpack.c.l.b16 %v1329
          %v1379 = vunpack.c.h.b16 %v1329
          %v1380 = vunpack.c.l.b16 %v1330
          %v1381 = vunpack.c.h.b16 %v1330
          %v1382 = vunpack.c.l.b16 %v1331
          %v1383 = vunpack.c.h.b16 %v1331
          %v1384 = vunpack.c.l.b16 %v1332
          %v1385 = vunpack.c.h.b16 %v1332
          %v1386 = vunpack.c.l.b16 %v1333
          %v1387 = vunpack.c.h.b16 %v1333
          %v1388 = vpack.c.b16 %v1358, %v1356
          %v1389 = vpack.c.b16 %v1359, %v1357
          %v1390 = vpack.c.b16 %v1362, %v1360
          %v1391 = vpack.c.b16 %v1363, %v1361
          %v1392 = vpack.c.b16 %v1366, %v1364
          %v1393 = vpack.c.b16 %v1367, %v1365
          %v1394 = vpack.c.b16 %v1370, %v1368
          %v1395 = vpack.c.b16 %v1371, %v1369
          %v1396 = vpack.c.b16 %v1374, %v1372
          %v1397 = vpack.c.b16 %v1375, %v1373
          %v1398 = vpack.c.b16 %v1378, %v1376
          %v1399 = vpack.c.b16 %v1379, %v1377
          %v1400 = vpack.c.b16 %v1382, %v1380
          %v1401 = vpack.c.b16 %v1383, %v1381
          %v1402 = vpack.c.b16 %v1386, %v1384
          %v1403 = vpack.c.b16 %v1387, %v1385
          %1420 = vmatpush.bf16.msra.mxu0 %v1402
          %1421 = vmatpush.bf16.msra.mxu0 %v1400
          %1422 = vmatpush.bf16.msra.mxu0 %v1398
          %1423 = vmatpush.bf16.msra.mxu0 %v1396
          %1424 = vmatpush.bf16.msra.mxu0 %v1394
          %1425 = vmatpush.bf16.msra.mxu0 %v1392
          %1426 = vmatpush.bf16.msra.mxu0 %v1390
          %1427 = vmatpush.bf16.msra.mxu0 %v1388
          %1428 = vmatmul.bf16.gmra.mxu0 %v1317
          %v1429 = vpop.f32.mrf.mxu0
          %v1430 = vadd.f32 %v1336, %v1429
          %v1431 = vpop.f32.mrf.mxu0
          %1432 = vdwg.mxu0
          %1433 = vmatpush.bf16.msra.mxu0 %v1403
          %1434 = vmatpush.bf16.msra.mxu0 %v1401
          %1435 = vmatpush.bf16.msra.mxu0 %v1399
          %1436 = vmatpush.bf16.msra.mxu0 %v1397
          %1437 = vmatpush.bf16.msra.mxu0 %v1395
          %1438 = vmatpush.bf16.msra.mxu0 %v1393
          %1439 = vmatpush.bf16.msra.mxu0 %v1391
          %1440 = vmatpush.bf16.msra.mxu0 %v1389
          %1441 = vmatmul.bf16.gmra.mxu0 %v1317
          %v1442 = vpop.f32.mrf.mxu0
          %v1443 = vadd.f32 %v1337, %v1442
          %v1444 = vpop.f32.mrf.mxu0
          %1445 = vdwg.mxu0
          %1446 = vst [vmem:[#allocation18] sm:$0xff] %v1430
          %1447 = vst [vmem:[#allocation18 + $0x8] sm:$0xff] %v1443
        $region116: #{decoder_forward.1} parent=47 // pred_fallthru
          _
        %s1448 = sand.u32 %s45, 1
        %s1449 = scalar_lea.sflag [#allocation20], %s1448
        %s1450 = sand.u32 %s246, 1
        %s1451 = smul.addr %s1450, 8
        %s1452 = scalar_lea.vmem [#allocation19], %s1451
        %s1453 = sand.u32 %s45, 1
        %s1454 = scalar_lea.sflag [#allocation20], %s1453
        %s1455 = sand.u32 %s272, 1
        %s1456 = smul.addr %s1455, 8
        %s1457 = scalar_lea.vmem [#allocation21], %s1456
        // Predicated region
        $region117: #{decoder_forward.1} parent=47 // pred_check
          %p1458 = pneg %p230
        $region118: #{decoder_forward.1} parent=47 // pred_check_branch
          %1460 = sbr.rel (%p1458) target = $region120
        $region119: #{decoder_forward.1} parent=47 // pred_region
          %1462 = vsyncadd [#allocation8], 0
          %s1464 = sshll.u32 [#allocation18], 4
          %s1465 = int_to_ptr.vmem [resolvable:$true] %s1464
          %s1466 = sshll.u32 %s9, 4
          %s1467 = int_to_ptr.hbm [resolvable:$true] %s1466
          %1469 = dma.vmem_to_hbm [thread:$0]  %s1465, 256, %s1467, [#allocation8]
        $region120: #{decoder_forward.1} parent=47 // pred_fallthru
          _
        // Predicated region
        $region121: #{decoder_forward.1} parent=47 // pred_check
          %p1470 = pneg %p256
        $region122: #{decoder_forward.1} parent=47 // pred_check_branch
          %1472 = sbr.rel (%p1470) target = $region124
        $region123: #{decoder_forward.1} parent=47 // pred_region
          %1474 = vsyncadd %s1449, 0
          %s1475 = smul.addr %s45, 8
          %s1476 = scalar_lea.hbm %s10, %s1475
          %s1478 = sshll.u32 %s1452, 4
          %s1479 = int_to_ptr.vmem [resolvable:$true] %s1478
          %s1480 = sshll.u32 %s1476, 4
          %s1481 = int_to_ptr.hbm [resolvable:$true] %s1480
          %1483 = dma.vmem_to_hbm [thread:$0]  %s1479, 128, %s1481, %s1449
        $region124: #{decoder_forward.1} parent=47 // pred_fallthru
          _
        // Predicated region
        $region125: #{decoder_forward.1} parent=47 // pred_check
          %p1484 = pneg %p282
        $region126: #{decoder_forward.1} parent=47 // pred_check_branch
          %1486 = sbr.rel (%p1484) target = $region128
        $region127: #{decoder_forward.1} parent=47 // pred_region
          %1488 = vsyncadd %s1454, 0
          %s1489 = smul.addr %s45, 8
          %s1490 = scalar_lea.hbm %s11, %s1489
          %s1492 = sshll.u32 %s1457, 4
          %s1493 = int_to_ptr.vmem [resolvable:$true] %s1492
          %s1494 = sshll.u32 %s1490, 4
          %s1495 = int_to_ptr.hbm [resolvable:$true] %s1494
          %1497 = dma.vmem_to_hbm [thread:$0]  %s1493, 128, %s1495, %s1454
        $region128: #{decoder_forward.1} parent=47 // pred_fallthru
          _
        // Predicated region
        $region129: #{decoder_forward.1} parent=47 // pred_check
          %p1498 = pneg %p230
        $region130: #{decoder_forward.1} parent=47 // pred_check_branch
          %1500 = sbr.rel (%p1498) target = $region132
        $region131: #{decoder_forward.1} parent=47 // pred_region
          %1502 = dma.done [#allocation8], 256
        $region132: #{decoder_forward.1} parent=47 // pred_fallthru
          _
      $region48: #{decoder_forward.1} parent=5 // pred_fallthru
        _
      %p1503 = scmp.le.s32.totalorder 2, %s40
      // Predicated region
      $region133: #{decoder_forward.1} parent=5 // pred_check
        %p1504 = pneg %p1503
      $region134: #{decoder_forward.1} parent=5 // pred_check_branch
        %1506 = sbr.rel (%p1504) target = $region136
      $region135: #{decoder_forward.1} parent=5 // pred_region
        %s1507 = ssub.s32 %s40, 2
        // Predicated region
        $region137: #{decoder_forward.1} parent=135 // pred_check
          %p1508 = pneg %p262
        $region138: #{decoder_forward.1} parent=135 // pred_check_branch
          %1510 = sbr.rel (%p1508) target = $region140
        $region139: #{decoder_forward.1} parent=135 // pred_region
          %s1511 = sand.u32 %s46, 1
          %s1512 = scalar_lea.sflag [#allocation20], %s1511
          %s1513 = sand.u32 %s247, 1
          %s1514 = smul.addr %s1513, 8
          %s1515 = scalar_lea.vmem [#allocation19], %s1514
          %1517 = dma.done %s1512, 128
        $region140: #{decoder_forward.1} parent=135 // pred_fallthru
          _
        // Predicated region
        $region141: #{decoder_forward.1} parent=135 // pred_check
          %p1518 = pneg %p288
        $region142: #{decoder_forward.1} parent=135 // pred_check_branch
          %1520 = sbr.rel (%p1518) target = $region144
        $region143: #{decoder_forward.1} parent=135 // pred_region
          %s1521 = sand.u32 %s46, 1
          %s1522 = scalar_lea.sflag [#allocation20], %s1521
          %s1523 = sand.u32 %s273, 1
          %s1524 = smul.addr %s1523, 8
          %s1525 = scalar_lea.vmem [#allocation21], %s1524
          %1527 = dma.done %s1522, 128
        $region144: #{decoder_forward.1} parent=135 // pred_fallthru
          _
      $region136: #{decoder_forward.1} parent=5 // pred_fallthru
        _
    $region6: #{decoder_forward.1} parent=1 // loop_footer
      %s44 = sadd.s32 1, %s40
    $region7: #{decoder_forward.1} parent=1 // loop_footer_branch
      %39 = sbr.rel target = $region3
    $region8: #{decoder_forward.1} parent=1 // loop_exit
      _
    %1528 = vsyncpa [#allocation7], 1
    %s1529 = scalar_lea.sflag [#allocation7], 1
    %1530 = vsyncpa %s1529, 1
    %1531 = vsyncpa [#allocation10], 1
    %s1532 = scalar_lea.sflag [#allocation10], 1
    %1533 = vsyncpa %s1532, 1
    %1534 = vsyncpa [#allocation13], 1
    %s1535 = scalar_lea.sflag [#allocation13], 1
    %1536 = vsyncpa %s1535, 1
    %1537 = vsyncpa [#allocation16], 1
    %1538 = vsyncpa [#allocation8], 1
    %s1539 = scalar_lea.sflag [#allocation8], 1
    %1540 = vsyncpa %s1539, 1
    %1541 = vsyncpa [#allocation20], 1
    %s1542 = scalar_lea.sflag [#allocation20], 1
    %1543 = vsyncpa %s1542, 1
  %1544 = vsyncmov [#allocation3]
  %s1545 = vpop.sfrf %1544
  %p1546 = scmp.eq.s32.totalorder %s1545, 0
  %p1547 = pneg %p1546
  %1549 = shalt.err (%p1547)
  %s1550 = scalar_lea.sflag [#allocation3], 1
  %1551 = vsyncmov %s1550
  %s1552 = vpop.sfrf %1551
  %p1553 = scmp.eq.s32.totalorder %s1552, 0
  %p1554 = pneg %p1553
  %1556 = shalt.err (%p1554)
  %s1557 = scalar_lea.sflag [#allocation3], 2
  %1558 = vsyncmov %s1557
  %s1559 = vpop.sfrf %1558
  %p1560 = scmp.eq.s32.totalorder %s1559, 0
  %p1561 = pneg %p1560
  %1563 = shalt.err (%p1561)
  %s1564 = scalar_lea.sflag [#allocation3], 3
  %1565 = vsyncmov %s1564
  %s1566 = vpop.sfrf %1565
  %p1567 = scmp.eq.s32.totalorder %s1566, 0
  %p1568 = pneg %p1567
  %1570 = shalt.err (%p1568)
  %s1571 = scalar_lea.sflag [#allocation3], 4
  %1572 = vsyncmov %s1571
  %s1573 = vpop.sfrf %1572
  %p1574 = scmp.eq.s32.totalorder %s1573, 0
  %p1575 = pneg %p1574
  %1577 = shalt.err (%p1575)
  %s1578 = scalar_lea.sflag [#allocation3], 5
  %1579 = vsyncmov %s1578
  %s1580 = vpop.sfrf %1579
  %p1581 = scmp.eq.s32.totalorder %s1580, 0
  %p1582 = pneg %p1581
  %1584 = shalt.err (%p1582)
  %s1585 = scalar_lea.sflag [#allocation3], 6
  %1586 = vsyncmov %s1585
  %s1587 = vpop.sfrf %1586
  %p1588 = scmp.eq.s32.totalorder %s1587, 0
  %p1589 = pneg %p1588
  %1591 = shalt.err (%p1589)
  %s1592 = scalar_lea.sflag [#allocation3], 7
  %1593 = vsyncmov %s1592
  %s1594 = vpop.sfrf %1593
  %p1595 = scmp.eq.s32.totalorder %s1594, 0
  %p1596 = pneg %p1595
  %1598 = shalt.err (%p1596)

</llo_original>
